<compile_context>
chip_gen: v6e
topology: v6e:2x2x1
jax: 0.10.0
libtpu: 0.0.40
codegen_flags: <defaults>
</compile_context>

<pallas_src>
import functools

import jax
import jax.numpy as jnp
from jax.experimental import pallas as pl
from jax.experimental.pallas import tpu as pltpu


# ----------------------------------------------------------------------------
# Pallas kernel: (bb, 9, tn) channel-major tile -> four MXU matmuls -> (bb, 64, tn).
# ----------------------------------------------------------------------------
def _frc_kernel(x_ref,                        # (bb, 9, tn)   f32
                w1_ref, b1_ref,               # (96, 9)  bf16, (96, 1) f32
                w2_ref, b2_ref,               # (96, 96) bf16, (96, 1) f32
                w3_ref, b3_ref,               # (64, 96) bf16, (64, 1) f32
                w4_ref, b4_ref,               # (64, 64) bf16, (64, 1) f32
                o_ref):                       # (bb, 64, tn)
    bb = x_ref.shape[0]
    w1 = w1_ref[...]
    w2 = w2_ref[...]
    w3 = w3_ref[...]
    w4 = w4_ref[...]
    b1 = b1_ref[...]
    b2 = b2_ref[...]
    b3 = b3_ref[...]
    b4 = b4_ref[...]
    # bb is small and static -> unrolled; weights stay resident across rows.
    for i in range(bb):
        x = x_ref[i].astype(jnp.bfloat16)                             # (9, tn)
        h = jnp.dot(w1, x, preferred_element_type=jnp.float32)
        h = jnp.maximum(h + b1, 0.0)                                  # (96, tn)
        h = jnp.dot(w2, h.astype(jnp.bfloat16),
                    preferred_element_type=jnp.float32)
        h = jnp.maximum(h + b2, 0.0)                                  # (96, tn)
        h = jnp.dot(w3, h.astype(jnp.bfloat16),
                    preferred_element_type=jnp.float32)
        h = jnp.maximum(h + b3, 0.0)                                  # (64, tn)
        h = jnp.dot(w4, h.astype(jnp.bfloat16),
                    preferred_element_type=jnp.float32)
        h = jnp.maximum(h + b4, 0.0)                                  # (64, tn)
        o_ref[i] = h.astype(o_ref.dtype)


# ----------------------------------------------------------------------------
# Wrapper
# ----------------------------------------------------------------------------
def _fold_bn(w, b, gamma, beta, mean, var, eps=1e-5):
    """Fold eval-mode BatchNorm1d into a Conv1d(k=1) weight/bias.

    w: (Cout, Cin) torch-style conv1d weight (squeezed k dim), b: (Cout,)
    Returns (w_eff (Cout, Cin), b_eff (Cout,)) for channel-major  W @ x.
    """
    s = gamma / jnp.sqrt(var + eps)                       # (Cout,)
    w_eff = w * s[:, None]                                # (Cout, Cin)
    b_eff = s * (b - mean) + beta                         # (Cout,)
    return w_eff.astype(jnp.float32), b_eff.astype(jnp.float32)


@functools.partial(jax.jit, static_argnames=("tn", "out_dtype"))
def face_rotate_convolution(corners, params, *, tn=2048, out_dtype=jnp.float32):
    """corners: (B, 9, N) float32 -> (B, 64, N) out_dtype (NCW, like PyTorch)."""
    B, C, N = corners.shape
    assert C == 9
    assert tn % 128 == 0 and tn <= 8192   # <=8192 keeps one config portable to v7x

    (w1, b1), (w2, b2), (w3, b3), (w4, b4) = params

    # --- fold the three rotations + the 1/3 average into the weights --------
    # rotation 0: channels 0:6, rotation 1: 3:9, rotation 2: [6:9, 0:3]
    W1 = jnp.zeros((96, 9), jnp.float32)
    W1 = W1.at[0:32, 0:6].set(w1)
    W1 = W1.at[32:64, 3:9].set(w1)
    W1 = W1.at[64:96, 6:9].set(w1[:, 0:3])
    W1 = W1.at[64:96, 0:3].set(w1[:, 3:6])
    B1 = jnp.tile(b1, 3)[:, None]                         # (96, 1)

    W2 = jnp.zeros((96, 96), jnp.float32)                 # block-diag(w2 x3)
    for r in range(3):
        W2 = W2.at[32 * r:32 * (r + 1), 32 * r:32 * (r + 1)].set(w2)
    B2 = jnp.tile(b2, 3)[:, None]                         # (96, 1)

    W3 = jnp.concatenate([w3, w3, w3], axis=1) / 3.0      # (64, 96), folds 1/3
    B3 = b3[:, None]                                      # (64, 1)
    W4 = w4                                               # (64, 64)
    B4 = b4[:, None]                                      # (64, 1)

    # bf16 MXU operands; f32 accumulation + f32 bias/ReLU epilogue in-kernel.
    W1, W2, W3, W4 = (w.astype(jnp.bfloat16) for w in (W1, W2, W3, W4))
    B1, B2, B3, B4 = (b.astype(jnp.float32) for b in (B1, B2, B3, B4))

    # --- lane-tile / batch-block selection -----------------------------------
    tn_eff = min(tn, pl.cdiv(N, 128) * 128)               # don't over-tile small N
    Np = pl.cdiv(N, tn_eff) * tn_eff
    n_tiles = Np // tn_eff

    # v7x has 2 TensorCores; keep >= 2 steps on a parallel grid axis.
    if B * n_tiles < 2 and tn_eff >= 256:
        tn_eff //= 2
        Np = pl.cdiv(N, tn_eff) * tn_eff
        n_tiles = Np // tn_eff

    # Small-N path: fold bb batch rows into one grid step to amortize the
    # ~0.35 us/step overhead (only when the lane tile got clamped small, and
    # only while keeping >= 2 total grid steps for the dual-TC split).
    bb = 1
    if tn_eff <= 512:
        for cand in (8, 4, 2):
            if B % cand == 0 and (B // cand) * n_tiles >= 2:
                bb = cand
                break

    x = corners if Np == N else jnp.pad(corners, ((0, 0), (0, 0), (0, Np - N)))

    # Weights/biases are tiny (< 50 KiB total in bf16); constant block index
    # keeps them resident in VMEM across the whole grid (DMA'd once).
    def full(a):
        return pl.BlockSpec(a.shape, lambda b, j: (0,) * a.ndim)

    macs = 96 * 9 + 96 * 96 + 64 * 96 + 64 * 64            # per face
    cost = pl.CostEstimate(
        flops=2 * B * N * macs,
        transcendentals=0,
        bytes_accessed=B * Np * (9 * corners.dtype.itemsize
                                 + 64 * jnp.dtype(out_dtype).itemsize)
                       + 2 * macs)

    out = pl.pallas_call(
        _frc_kernel,
        out_shape=jax.ShapeDtypeStruct((B, 64, Np), out_dtype),
        grid_spec=pltpu.PrefetchScalarGridSpec(
            num_scalar_prefetch=0,
            grid=(B // bb, n_tiles),
            in_specs=[
                pl.BlockSpec((bb, 9, tn_eff), lambda b, j: (b, 0, j)),
                full(W1), full(B1),
                full(W2), full(B2),
                full(W3), full(B3),
                full(W4), full(B4),
            ],
            out_specs=pl.BlockSpec((bb, 64, tn_eff), lambda b, j: (b, 0, j)),
        ),
        compiler_params=pltpu.CompilerParams(
            dimension_semantics=("parallel", "parallel")),
        cost_estimate=cost,
    )(x, W1, B1, W2, B2, W3, B3, W4, B4)

    return out if Np == N else out[:, :, :N]


# ----------------------------------------------------------------------------
# Deterministic parameter construction (synthetic; no checkpoint).
# ----------------------------------------------------------------------------
def make_params(key):
    def layer(key, cin, cout):
        kw, kb, kg, kbt, km, kv = jax.random.split(key, 6)
        w = jax.random.normal(kw, (cout, cin), jnp.float32) * 0.1   # conv weight
        b = jax.random.normal(kb, (cout,), jnp.float32) * 0.1       # conv bias
        gamma = 1.0 + 0.1 * jax.random.normal(kg, (cout,), jnp.float32)
        beta = 0.1 * jax.random.normal(kbt, (cout,), jnp.float32)
        mean = 0.1 * jax.random.normal(km, (cout,), jnp.float32)
        var = jnp.abs(jax.random.normal(kv, (cout,), jnp.float32)) + 0.5
        return _fold_bn(w, b, gamma, beta, mean, var)

    k1, k2, k3, k4 = jax.random.split(key, 4)
    return (layer(k1, 6, 32),    # rotate_mlp conv1 + bn1
            layer(k2, 32, 32),   # rotate_mlp conv2 + bn2
            layer(k3, 32, 64),   # fusion_mlp conv1 + bn1
            layer(k4, 64, 64))   # fusion_mlp conv2 + bn2


# Pure-JAX f32 reference (mirrors the PyTorch forward, NCW layout).
def reference(corners, params):
    (w1, b1), (w2, b2), (w3, b3), (w4, b4) = params

    def conv_bn_relu(x, w, b):                            # x: (B, Cin, N)
        return jnp.maximum(jnp.einsum('oc,bcn->bon', w, x) + b[None, :, None],
                           0.0)

    def rotate_mlp(x):
        return conv_bn_relu(conv_bn_relu(x, w1, b1), w2, b2)

    fea = (rotate_mlp(corners[:, 0:6])
           + rotate_mlp(corners[:, 3:9])
           + rotate_mlp(jnp.concatenate([corners[:, 6:9], corners[:, 0:3]],
                                        axis=1))) / 3.0
    return conv_bn_relu(conv_bn_relu(fea, w3, b3), w4, b4)


if __name__ == "__main__":
    key = jax.random.PRNGKey(0)
    kx, kp = jax.random.split(key)

    B, N = 2, 200                      # small shapes; N not a multiple of 128
    corners = jax.random.normal(kx, (B, 9, N), jnp.float32)
    params = make_params(kp)

    out = face_rotate_convolution(corners, params)
    out = jax.block_until_ready(out)

    ref = reference(corners, params)
    assert out.shape == (B, 64, N), out.shape
    # bf16 MXU operands (f32 accumulation) -> looser tolerance than pure f32.
    err = float(jnp.max(jnp.abs(out - ref)))
    assert jnp.allclose(out, ref, atol=3e-2, rtol=3e-2), f"mismatch, max abs err {err}"

    print("KERNEL_OK")
</pallas_src>

<mosaic_0001>
module attributes {stable_mosaic.version = 11 : i64} {
  func.func @_frc_kernel(%arg0: i32, %arg1: i32, %arg2: memref<1x9x256xf32, #tpu.memory_space<vmem>>, %arg3: memref<96x9xbf16, #tpu.memory_space<vmem>>, %arg4: memref<96x1xf32, #tpu.memory_space<vmem>>, %arg5: memref<96x96xbf16, #tpu.memory_space<vmem>>, %arg6: memref<96x1xf32, #tpu.memory_space<vmem>>, %arg7: memref<64x96xbf16, #tpu.memory_space<vmem>>, %arg8: memref<64x1xf32, #tpu.memory_space<vmem>>, %arg9: memref<64x64xbf16, #tpu.memory_space<vmem>>, %arg10: memref<64x1xf32, #tpu.memory_space<vmem>>, %arg11: memref<1x64x256xf32, #tpu.memory_space<vmem>>) attributes {dimension_semantics = [#tpu.dimension_semantics<parallel>, #tpu.dimension_semantics<parallel>], iteration_bounds = array<i64: 2, 1>, scalar_prefetch = 0 : i64, scratch_operands = 0 : i64, tpu.core_type = #tpu.core_type<tc>, window_params = [{transform_indices = @transform_0, window_bounds = array<i64: 1, 9, 256>}, {pipeline_mode = #tpu.pipeline_mode<synchronous>, transform_indices = @transform_1, window_bounds = array<i64: 96, 9>}, {pipeline_mode = #tpu.pipeline_mode<synchronous>, transform_indices = @transform_2, window_bounds = array<i64: 96, 1>}, {pipeline_mode = #tpu.pipeline_mode<synchronous>, transform_indices = @transform_3, window_bounds = array<i64: 96, 96>}, {pipeline_mode = #tpu.pipeline_mode<synchronous>, transform_indices = @transform_4, window_bounds = array<i64: 96, 1>}, {pipeline_mode = #tpu.pipeline_mode<synchronous>, transform_indices = @transform_5, window_bounds = array<i64: 64, 96>}, {pipeline_mode = #tpu.pipeline_mode<synchronous>, transform_indices = @transform_6, window_bounds = array<i64: 64, 1>}, {pipeline_mode = #tpu.pipeline_mode<synchronous>, transform_indices = @transform_7, window_bounds = array<i64: 64, 64>}, {pipeline_mode = #tpu.pipeline_mode<synchronous>, transform_indices = @transform_8, window_bounds = array<i64: 64, 1>}, {transform_indices = @transform_9, window_bounds = array<i64: 1, 64, 256>}]} {
    %c0 = arith.constant 0 : index
    %c0_0 = arith.constant 0 : index
    %0 = vector.load %arg3[%c0, %c0_0] : memref<96x9xbf16, #tpu.memory_space<vmem>>, vector<96x9xbf16>
    %c0_1 = arith.constant 0 : index
    %c0_2 = arith.constant 0 : index
    %1 = vector.load %arg5[%c0_1, %c0_2] : memref<96x96xbf16, #tpu.memory_space<vmem>>, vector<96x96xbf16>
    %c0_3 = arith.constant 0 : index
    %c0_4 = arith.constant 0 : index
    %2 = vector.load %arg7[%c0_3, %c0_4] : memref<64x96xbf16, #tpu.memory_space<vmem>>, vector<64x96xbf16>
    %c0_5 = arith.constant 0 : index
    %c0_6 = arith.constant 0 : index
    %3 = vector.load %arg9[%c0_5, %c0_6] : memref<64x64xbf16, #tpu.memory_space<vmem>>, vector<64x64xbf16>
    %c0_7 = arith.constant 0 : index
    %c0_8 = arith.constant 0 : index
    %4 = vector.load %arg4[%c0_7, %c0_8] : memref<96x1xf32, #tpu.memory_space<vmem>>, vector<96x1xf32>
    %c0_9 = arith.constant 0 : index
    %c0_10 = arith.constant 0 : index
    %5 = vector.load %arg6[%c0_9, %c0_10] : memref<96x1xf32, #tpu.memory_space<vmem>>, vector<96x1xf32>
    %c0_11 = arith.constant 0 : index
    %c0_12 = arith.constant 0 : index
    %6 = vector.load %arg8[%c0_11, %c0_12] : memref<64x1xf32, #tpu.memory_space<vmem>>, vector<64x1xf32>
    %c0_13 = arith.constant 0 : index
    %c0_14 = arith.constant 0 : index
    %7 = vector.load %arg10[%c0_13, %c0_14] : memref<64x1xf32, #tpu.memory_space<vmem>>, vector<64x1xf32>
    %c0_15 = arith.constant 0 : index
    %c0_16 = arith.constant 0 : index
    %c0_17 = arith.constant 0 : index
    %8 = vector.load %arg2[%c0_15, %c0_16, %c0_17] : memref<1x9x256xf32, #tpu.memory_space<vmem>>, vector<1x9x256xf32>
    %9 = vector.shape_cast %8 : vector<1x9x256xf32> to vector<9x256xf32>
    %10 = arith.truncf %9 : vector<9x256xf32> to vector<9x256xbf16>
    %cst = arith.constant dense<0.000000e+00> : vector<96x256xf32>
    %11 = tpu.matmul %0, %10, %cst {dimension_numbers = #tpu.dot_dimension_numbers<[1], [0], [0], [1], [0, 0, 1, 1], [], []>} : vector<96x9xbf16>, vector<9x256xbf16>, vector<96x256xf32> -> vector<96x256xf32>
    %12 = vector.broadcast %4 : vector<96x1xf32> to vector<96x256xf32>
    %13 = arith.addf %11, %12 : vector<96x256xf32>
    %cst_18 = arith.constant 0.000000e+00 : f32
    %14 = vector.broadcast %cst_18 : f32 to vector<96x256xf32>
    %15 = arith.maximumf %13, %14 : vector<96x256xf32>
    %16 = arith.truncf %15 : vector<96x256xf32> to vector<96x256xbf16>
    %cst_19 = arith.constant dense<0.000000e+00> : vector<96x256xf32>
    %17 = tpu.matmul %1, %16, %cst_19 {dimension_numbers = #tpu.dot_dimension_numbers<[1], [0], [0], [1], [0, 0, 1, 1], [], []>} : vector<96x96xbf16>, vector<96x256xbf16>, vector<96x256xf32> -> vector<96x256xf32>
    %18 = vector.broadcast %5 : vector<96x1xf32> to vector<96x256xf32>
    %19 = arith.addf %17, %18 : vector<96x256xf32>
    %cst_20 = arith.constant 0.000000e+00 : f32
    %20 = vector.broadcast %cst_20 : f32 to vector<96x256xf32>
    %21 = arith.maximumf %19, %20 : vector<96x256xf32>
    %22 = arith.truncf %21 : vector<96x256xf32> to vector<96x256xbf16>
    %cst_21 = arith.constant dense<0.000000e+00> : vector<64x256xf32>
    %23 = tpu.matmul %2, %22, %cst_21 {dimension_numbers = #tpu.dot_dimension_numbers<[1], [0], [0], [1], [0, 0, 1, 1], [], []>} : vector<64x96xbf16>, vector<96x256xbf16>, vector<64x256xf32> -> vector<64x256xf32>
    %24 = vector.broadcast %6 : vector<64x1xf32> to vector<64x256xf32>
    %25 = arith.addf %23, %24 : vector<64x256xf32>
    %cst_22 = arith.constant 0.000000e+00 : f32
    %26 = vector.broadcast %cst_22 : f32 to vector<64x256xf32>
    %27 = arith.maximumf %25, %26 : vector<64x256xf32>
    %28 = arith.truncf %27 : vector<64x256xf32> to vector<64x256xbf16>
    %cst_23 = arith.constant dense<0.000000e+00> : vector<64x256xf32>
    %29 = tpu.matmul %3, %28, %cst_23 {dimension_numbers = #tpu.dot_dimension_numbers<[1], [0], [0], [1], [0, 0, 1, 1], [], []>} : vector<64x64xbf16>, vector<64x256xbf16>, vector<64x256xf32> -> vector<64x256xf32>
    %30 = vector.broadcast %7 : vector<64x1xf32> to vector<64x256xf32>
    %31 = arith.addf %29, %30 : vector<64x256xf32>
    %cst_24 = arith.constant 0.000000e+00 : f32
    %32 = vector.broadcast %cst_24 : f32 to vector<64x256xf32>
    %33 = arith.maximumf %31, %32 : vector<64x256xf32>
    %c0_25 = arith.constant 0 : index
    %c0_26 = arith.constant 0 : index
    %c0_27 = arith.constant 0 : index
    %34 = vector.load %arg11[%c0_25, %c0_26, %c0_27] : memref<1x64x256xf32, #tpu.memory_space<vmem>>, vector<1x64x256xf32>
    %35 = vector.shape_cast %34 : vector<1x64x256xf32> to vector<64x256xf32>
    %36 = vector.shape_cast %33 : vector<64x256xf32> to vector<1x64x256xf32>
    tpu.vector_store %arg11[%c0_25, %c0_26, %c0_27], %36 {strides = array<i32>} : memref<1x64x256xf32, #tpu.memory_space<vmem>>, vector<1x64x256xf32>,
    return
  }
  func.func @transform_0(%arg0: i32, %arg1: i32) -> (i32, i32, i32) {
    %c0_i32 = arith.constant 0 : i32
    %c0_i32_0 = arith.constant 0 : i32
    return %arg0, %c0_i32, %arg1 : i32, i32, i32
  }
  func.func @transform_1(%arg0: i32, %arg1: i32) -> (i32, i32) {
    %c0_i32 = arith.constant 0 : i32
    %c0_i32_0 = arith.constant 0 : i32
    %c0_i32_1 = arith.constant 0 : i32
    return %c0_i32, %c0_i32_0 : i32, i32
  }
  func.func @transform_2(%arg0: i32, %arg1: i32) -> (i32, i32) {
    %c0_i32 = arith.constant 0 : i32
    %c0_i32_0 = arith.constant 0 : i32
    %c0_i32_1 = arith.constant 0 : i32
    return %c0_i32, %c0_i32_0 : i32, i32
  }
  func.func @transform_3(%arg0: i32, %arg1: i32) -> (i32, i32) {
    %c0_i32 = arith.constant 0 : i32
    %c0_i32_0 = arith.constant 0 : i32
    %c0_i32_1 = arith.constant 0 : i32
    return %c0_i32, %c0_i32_0 : i32, i32
  }
  func.func @transform_4(%arg0: i32, %arg1: i32) -> (i32, i32) {
    %c0_i32 = arith.constant 0 : i32
    %c0_i32_0 = arith.constant 0 : i32
    %c0_i32_1 = arith.constant 0 : i32
    return %c0_i32, %c0_i32_0 : i32, i32
  }
  func.func @transform_5(%arg0: i32, %arg1: i32) -> (i32, i32) {
    %c0_i32 = arith.constant 0 : i32
    %c0_i32_0 = arith.constant 0 : i32
    %c0_i32_1 = arith.constant 0 : i32
    return %c0_i32, %c0_i32_0 : i32, i32
  }
  func.func @transform_6(%arg0: i32, %arg1: i32) -> (i32, i32) {
    %c0_i32 = arith.constant 0 : i32
    %c0_i32_0 = arith.constant 0 : i32
    %c0_i32_1 = arith.constant 0 : i32
    return %c0_i32, %c0_i32_0 : i32, i32
  }
  func.func @transform_7(%arg0: i32, %arg1: i32) -> (i32, i32) {
    %c0_i32 = arith.constant 0 : i32
    %c0_i32_0 = arith.constant 0 : i32
    %c0_i32_1 = arith.constant 0 : i32
    return %c0_i32, %c0_i32_0 : i32, i32
  }
  func.func @transform_8(%arg0: i32, %arg1: i32) -> (i32, i32) {
    %c0_i32 = arith.constant 0 : i32
    %c0_i32_0 = arith.constant 0 : i32
    %c0_i32_1 = arith.constant 0 : i32
    return %c0_i32, %c0_i32_0 : i32, i32
  }
  func.func @transform_9(%arg0: i32, %arg1: i32) -> (i32, i32, i32) {
    %c0_i32 = arith.constant 0 : i32
    %c0_i32_0 = arith.constant 0 : i32
    return %arg0, %c0_i32, %arg1 : i32, i32, i32
  }
}

</mosaic_0001>

<llo_original>
// kernel: tile.13
$region0: #{tile.13}
  #allocation0 [shape = 's32[1]{0}', space=sflag, size = 0x4, scoped, tag = 'scoped memory for tile.13']
  %s0 = inlined_call_operand.vmem [shape: f32[32], index: 0, kind: input, shape index: {}]
  %s1 = inlined_call_operand.vmem [shape: f32[3,32], index: 1, kind: output, shape index: {}]
  // Predicated region
  $region2: #{tile.13} parent=0 // pred_check
    _
  $region3: #{tile.13} parent=0 // pred_check_branch
    %3 = sbr.rel (0) target = $region5
  $region4: #{tile.13} parent=0 // pred_region
    _
  $region5: #{tile.13} parent=0 // pred_fallthru
    _
  %v4 = vld [vmem:[%s0] ss:$0 sm:$0xff]
  %5 = vst [vmem:[%s1] sm:$0xf] %v4

// kernel: tile.1
$region0: #{tile.1}
  %s0 = inlined_call_operand.vmem [shape: f32[3,32], index: 0, kind: input, shape index: {}]
  %s1 = inlined_call_operand.vmem [shape: f32[96,1], index: 1, kind: output, shape index: {}]
  $region1: #{tile.1} parent=0
    #allocation0 [shape = 'u8[4096]{0}', space=vmem, size = 0x1000, scoped, tag = 'scoped mem for input reshape']
    %s3 = sshll.u32 1, 4
    %s4 = ssub.s32 %s3, 1
    %v5 = vld [vmem:[%s0] sm:%s4]
    %6 = vst [vmem:[#allocation0] sm:%s4] %v5
    %v7 = vld [vmem:[#allocation0] sm:$0x7]
    %vm8 = vcmask 7168
    %9 = vst.msk [vmem:[%s1] sm:$0x1] %vm8, %v7
    %s10 = scalar_lea.vmem %s1, 31
    %11 = vst.msk [vmem:[%s10] sm:$0x2] %vm8, %v7
    %s12 = scalar_lea.vmem %s1, 62
    %13 = vst.msk [vmem:[%s12] sm:$0x4] %vm8, %v7
    %v14 = vld [vmem:[#allocation0] sm:$0x7]
    %15 = vrot.lane.b32.xlu0 %v14, 127
    %v16 = vpop.permute.xlu0 %15
    %vm17 = vcmask 7168
    %s18 = scalar_lea.vmem %s1, 1
    %19 = vst.msk [vmem:[%s18] sm:$0x1] %vm17, %v16
    %s20 = scalar_lea.vmem %s1, 32
    %21 = vst.msk [vmem:[%s20] sm:$0x2] %vm17, %v16
    %s22 = scalar_lea.vmem %s1, 63
    %23 = vst.msk [vmem:[%s22] sm:$0x4] %vm17, %v16
    %v24 = vld [vmem:[#allocation0] sm:$0x7]
    %25 = vrot.lane.b32.xlu0 %v24, 126
    %v26 = vpop.permute.xlu0 %25
    %vm27 = vcmask 7168
    %s28 = scalar_lea.vmem %s1, 2
    %29 = vst.msk [vmem:[%s28] sm:$0x1] %vm27, %v26
    %s30 = scalar_lea.vmem %s1, 33
    %31 = vst.msk [vmem:[%s30] sm:$0x2] %vm27, %v26
    %s32 = scalar_lea.vmem %s1, 64
    %33 = vst.msk [vmem:[%s32] sm:$0x4] %vm27, %v26
    %v34 = vld [vmem:[#allocation0] sm:$0x7]
    %35 = vrot.lane.b32.xlu0 %v34, 125
    %v36 = vpop.permute.xlu0 %35
    %vm37 = vcmask 7168
    %s38 = scalar_lea.vmem %s1, 3
    %39 = vst.msk [vmem:[%s38] sm:$0x1] %vm37, %v36
    %s40 = scalar_lea.vmem %s1, 34
    %41 = vst.msk [vmem:[%s40] sm:$0x2] %vm37, %v36
    %s42 = scalar_lea.vmem %s1, 65
    %43 = vst.msk [vmem:[%s42] sm:$0x4] %vm37, %v36
    %v44 = vld [vmem:[#allocation0] sm:$0x7]
    %45 = vrot.lane.b32.xlu0 %v44, 124
    %v46 = vpop.permute.xlu0 %45
    %vm47 = vcmask 7168
    %s48 = scalar_lea.vmem %s1, 4
    %49 = vst.msk [vmem:[%s48] sm:$0x1] %vm47, %v46
    %s50 = scalar_lea.vmem %s1, 35
    %51 = vst.msk [vmem:[%s50] sm:$0x2] %vm47, %v46
    %s52 = scalar_lea.vmem %s1, 66
    %53 = vst.msk [vmem:[%s52] sm:$0x4] %vm47, %v46
    %v54 = vld [vmem:[#allocation0] sm:$0x7]
    %55 = vrot.lane.b32.xlu0 %v54, 123
    %v56 = vpop.permute.xlu0 %55
    %vm57 = vcmask 7168
    %s58 = scalar_lea.vmem %s1, 5
    %59 = vst.msk [vmem:[%s58] sm:$0x1] %vm57, %v56
    %s60 = scalar_lea.vmem %s1, 36
    %61 = vst.msk [vmem:[%s60] sm:$0x2] %vm57, %v56
    %s62 = scalar_lea.vmem %s1, 67
    %63 = vst.msk [vmem:[%s62] sm:$0x4] %vm57, %v56
    %v64 = vld [vmem:[#allocation0] sm:$0x7]
    %65 = vrot.lane.b32.xlu0 %v64, 122
    %v66 = vpop.permute.xlu0 %65
    %vm67 = vcmask 7168
    %s68 = scalar_lea.vmem %s1, 6
    %69 = vst.msk [vmem:[%s68] sm:$0x1] %vm67, %v66
    %s70 = scalar_lea.vmem %s1, 37
    %71 = vst.msk [vmem:[%s70] sm:$0x2] %vm67, %v66
    %s72 = scalar_lea.vmem %s1, 68
    %73 = vst.msk [vmem:[%s72] sm:$0x4] %vm67, %v66
    %v74 = vld [vmem:[#allocation0] sm:$0x7]
    %75 = vrot.lane.b32.xlu0 %v74, 121
    %v76 = vpop.permute.xlu0 %75
    %vm77 = vcmask 7168
    %s78 = scalar_lea.vmem %s1, 7
    %79 = vst.msk [vmem:[%s78] sm:$0x1] %vm77, %v76
    %s80 = scalar_lea.vmem %s1, 38
    %81 = vst.msk [vmem:[%s80] sm:$0x2] %vm77, %v76
    %s82 = scalar_lea.vmem %s1, 69
    %83 = vst.msk [vmem:[%s82] sm:$0x4] %vm77, %v76
    %v84 = vld [vmem:[#allocation0] sm:$0x7]
    %85 = vrot.lane.b32.xlu0 %v84, 120
    %v86 = vpop.permute.xlu0 %85
    %vm87 = vcmask 7168
    %s88 = scalar_lea.vmem %s1, 8
    %89 = vst.msk [vmem:[%s88] sm:$0x1] %vm87, %v86
    %s90 = scalar_lea.vmem %s1, 39
    %91 = vst.msk [vmem:[%s90] sm:$0x2] %vm87, %v86
    %s92 = scalar_lea.vmem %s1, 70
    %93 = vst.msk [vmem:[%s92] sm:$0x4] %vm87, %v86
    %v94 = vld [vmem:[#allocation0] sm:$0x7]
    %95 = vrot.lane.b32.xlu0 %v94, 119
    %v96 = vpop.permute.xlu0 %95
    %vm97 = vcmask 7168
    %s98 = scalar_lea.vmem %s1, 9
    %99 = vst.msk [vmem:[%s98] sm:$0x1] %vm97, %v96
    %s100 = scalar_lea.vmem %s1, 40
    %101 = vst.msk [vmem:[%s100] sm:$0x2] %vm97, %v96
    %s102 = scalar_lea.vmem %s1, 71
    %103 = vst.msk [vmem:[%s102] sm:$0x4] %vm97, %v96
    %v104 = vld [vmem:[#allocation0] sm:$0x7]
    %105 = vrot.lane.b32.xlu0 %v104, 118
    %v106 = vpop.permute.xlu0 %105
    %vm107 = vcmask 7168
    %s108 = scalar_lea.vmem %s1, 10
    %109 = vst.msk [vmem:[%s108] sm:$0x1] %vm107, %v106
    %s110 = scalar_lea.vmem %s1, 41
    %111 = vst.msk [vmem:[%s110] sm:$0x2] %vm107, %v106
    %s112 = scalar_lea.vmem %s1, 72
    %113 = vst.msk [vmem:[%s112] sm:$0x4] %vm107, %v106
    %v114 = vld [vmem:[#allocation0] sm:$0x7]
    %115 = vrot.lane.b32.xlu0 %v114, 117
    %v116 = vpop.permute.xlu0 %115
    %vm117 = vcmask 7168
    %s118 = scalar_lea.vmem %s1, 11
    %119 = vst.msk [vmem:[%s118] sm:$0x1] %vm117, %v116
    %s120 = scalar_lea.vmem %s1, 42
    %121 = vst.msk [vmem:[%s120] sm:$0x2] %vm117, %v116
    %s122 = scalar_lea.vmem %s1, 73
    %123 = vst.msk [vmem:[%s122] sm:$0x4] %vm117, %v116
    %v124 = vld [vmem:[#allocation0] sm:$0x7]
    %125 = vrot.lane.b32.xlu0 %v124, 116
    %v126 = vpop.permute.xlu0 %125
    %vm127 = vcmask 7168
    %s128 = scalar_lea.vmem %s1, 12
    %129 = vst.msk [vmem:[%s128] sm:$0x1] %vm127, %v126
    %s130 = scalar_lea.vmem %s1, 43
    %131 = vst.msk [vmem:[%s130] sm:$0x2] %vm127, %v126
    %s132 = scalar_lea.vmem %s1, 74
    %133 = vst.msk [vmem:[%s132] sm:$0x4] %vm127, %v126
    %v134 = vld [vmem:[#allocation0] sm:$0x7]
    %135 = vrot.lane.b32.xlu0 %v134, 115
    %v136 = vpop.permute.xlu0 %135
    %vm137 = vcmask 7168
    %s138 = scalar_lea.vmem %s1, 13
    %139 = vst.msk [vmem:[%s138] sm:$0x1] %vm137, %v136
    %s140 = scalar_lea.vmem %s1, 44
    %141 = vst.msk [vmem:[%s140] sm:$0x2] %vm137, %v136
    %s142 = scalar_lea.vmem %s1, 75
    %143 = vst.msk [vmem:[%s142] sm:$0x4] %vm137, %v136
    %v144 = vld [vmem:[#allocation0] sm:$0x7]
    %145 = vrot.lane.b32.xlu0 %v144, 114
    %v146 = vpop.permute.xlu0 %145
    %vm147 = vcmask 7168
    %s148 = scalar_lea.vmem %s1, 14
    %149 = vst.msk [vmem:[%s148] sm:$0x1] %vm147, %v146
    %s150 = scalar_lea.vmem %s1, 45
    %151 = vst.msk [vmem:[%s150] sm:$0x2] %vm147, %v146
    %s152 = scalar_lea.vmem %s1, 76
    %153 = vst.msk [vmem:[%s152] sm:$0x4] %vm147, %v146
    %v154 = vld [vmem:[#allocation0] sm:$0x7]
    %155 = vrot.lane.b32.xlu0 %v154, 113
    %v156 = vpop.permute.xlu0 %155
    %vm157 = vcmask 7168
    %s158 = scalar_lea.vmem %s1, 15
    %159 = vst.msk [vmem:[%s158] sm:$0x1] %vm157, %v156
    %s160 = scalar_lea.vmem %s1, 46
    %161 = vst.msk [vmem:[%s160] sm:$0x2] %vm157, %v156
    %s162 = scalar_lea.vmem %s1, 77
    %163 = vst.msk [vmem:[%s162] sm:$0x4] %vm157, %v156
    %v164 = vld [vmem:[#allocation0] sm:$0x7]
    %165 = vrot.lane.b32.xlu0 %v164, 112
    %v166 = vpop.permute.xlu0 %165
    %vm167 = vcmask 7168
    %s168 = scalar_lea.vmem %s1, 16
    %169 = vst.msk [vmem:[%s168] sm:$0x1] %vm167, %v166
    %s170 = scalar_lea.vmem %s1, 47
    %171 = vst.msk [vmem:[%s170] sm:$0x2] %vm167, %v166
    %s172 = scalar_lea.vmem %s1, 78
    %173 = vst.msk [vmem:[%s172] sm:$0x4] %vm167, %v166
    %v174 = vld [vmem:[#allocation0] sm:$0x7]
    %175 = vrot.lane.b32.xlu0 %v174, 111
    %v176 = vpop.permute.xlu0 %175
    %vm177 = vcmask 7168
    %s178 = scalar_lea.vmem %s1, 17
    %179 = vst.msk [vmem:[%s178] sm:$0x1] %vm177, %v176
    %s180 = scalar_lea.vmem %s1, 48
    %181 = vst.msk [vmem:[%s180] sm:$0x2] %vm177, %v176
    %s182 = scalar_lea.vmem %s1, 79
    %183 = vst.msk [vmem:[%s182] sm:$0x4] %vm177, %v176
    %v184 = vld [vmem:[#allocation0] sm:$0x7]
    %185 = vrot.lane.b32.xlu0 %v184, 110
    %v186 = vpop.permute.xlu0 %185
    %vm187 = vcmask 7168
    %s188 = scalar_lea.vmem %s1, 18
    %189 = vst.msk [vmem:[%s188] sm:$0x1] %vm187, %v186
    %s190 = scalar_lea.vmem %s1, 49
    %191 = vst.msk [vmem:[%s190] sm:$0x2] %vm187, %v186
    %s192 = scalar_lea.vmem %s1, 80
    %193 = vst.msk [vmem:[%s192] sm:$0x4] %vm187, %v186
    %v194 = vld [vmem:[#allocation0] sm:$0x7]
    %195 = vrot.lane.b32.xlu0 %v194, 109
    %v196 = vpop.permute.xlu0 %195
    %vm197 = vcmask 7168
    %s198 = scalar_lea.vmem %s1, 19
    %199 = vst.msk [vmem:[%s198] sm:$0x1] %vm197, %v196
    %s200 = scalar_lea.vmem %s1, 50
    %201 = vst.msk [vmem:[%s200] sm:$0x2] %vm197, %v196
    %s202 = scalar_lea.vmem %s1, 81
    %203 = vst.msk [vmem:[%s202] sm:$0x4] %vm197, %v196
    %v204 = vld [vmem:[#allocation0] sm:$0x7]
    %205 = vrot.lane.b32.xlu0 %v204, 108
    %v206 = vpop.permute.xlu0 %205
    %vm207 = vcmask 7168
    %s208 = scalar_lea.vmem %s1, 20
    %209 = vst.msk [vmem:[%s208] sm:$0x1] %vm207, %v206
    %s210 = scalar_lea.vmem %s1, 51
    %211 = vst.msk [vmem:[%s210] sm:$0x2] %vm207, %v206
    %s212 = scalar_lea.vmem %s1, 82
    %213 = vst.msk [vmem:[%s212] sm:$0x4] %vm207, %v206
    %v214 = vld [vmem:[#allocation0] sm:$0x7]
    %215 = vrot.lane.b32.xlu0 %v214, 107
    %v216 = vpop.permute.xlu0 %215
    %vm217 = vcmask 7168
    %s218 = scalar_lea.vmem %s1, 21
    %219 = vst.msk [vmem:[%s218] sm:$0x1] %vm217, %v216
    %s220 = scalar_lea.vmem %s1, 52
    %221 = vst.msk [vmem:[%s220] sm:$0x2] %vm217, %v216
    %s222 = scalar_lea.vmem %s1, 83
    %223 = vst.msk [vmem:[%s222] sm:$0x4] %vm217, %v216
    %v224 = vld [vmem:[#allocation0] sm:$0x7]
    %225 = vrot.lane.b32.xlu0 %v224, 106
    %v226 = vpop.permute.xlu0 %225
    %vm227 = vcmask 7168
    %s228 = scalar_lea.vmem %s1, 22
    %229 = vst.msk [vmem:[%s228] sm:$0x1] %vm227, %v226
    %s230 = scalar_lea.vmem %s1, 53
    %231 = vst.msk [vmem:[%s230] sm:$0x2] %vm227, %v226
    %s232 = scalar_lea.vmem %s1, 84
    %233 = vst.msk [vmem:[%s232] sm:$0x4] %vm227, %v226
    %v234 = vld [vmem:[#allocation0] sm:$0x7]
    %235 = vrot.lane.b32.xlu0 %v234, 105
    %v236 = vpop.permute.xlu0 %235
    %vm237 = vcmask 7168
    %s238 = scalar_lea.vmem %s1, 23
    %239 = vst.msk [vmem:[%s238] sm:$0x1] %vm237, %v236
    %s240 = scalar_lea.vmem %s1, 54
    %241 = vst.msk [vmem:[%s240] sm:$0x2] %vm237, %v236
    %s242 = scalar_lea.vmem %s1, 85
    %243 = vst.msk [vmem:[%s242] sm:$0x4] %vm237, %v236
    %v244 = vld [vmem:[#allocation0] sm:$0x7]
    %245 = vrot.lane.b32.xlu0 %v244, 104
    %v246 = vpop.permute.xlu0 %245
    %vm247 = vcmask 7168
    %s248 = scalar_lea.vmem %s1, 24
    %249 = vst.msk [vmem:[%s248] sm:$0x1] %vm247, %v246
    %s250 = scalar_lea.vmem %s1, 55
    %251 = vst.msk [vmem:[%s250] sm:$0x2] %vm247, %v246
    %s252 = scalar_lea.vmem %s1, 86
    %253 = vst.msk [vmem:[%s252] sm:$0x4] %vm247, %v246
    %v254 = vld [vmem:[#allocation0] sm:$0x7]
    %255 = vrot.lane.b32.xlu0 %v254, 103
    %v256 = vpop.permute.xlu0 %255
    %vm257 = vcmask 7168
    %s258 = scalar_lea.vmem %s1, 25
    %259 = vst.msk [vmem:[%s258] sm:$0x1] %vm257, %v256
    %s260 = scalar_lea.vmem %s1, 56
    %261 = vst.msk [vmem:[%s260] sm:$0x2] %vm257, %v256
    %s262 = scalar_lea.vmem %s1, 87
    %263 = vst.msk [vmem:[%s262] sm:$0x4] %vm257, %v256
    %v264 = vld [vmem:[#allocation0] sm:$0x7]
    %265 = vrot.lane.b32.xlu0 %v264, 102
    %v266 = vpop.permute.xlu0 %265
    %vm267 = vcmask 7168
    %s268 = scalar_lea.vmem %s1, 26
    %269 = vst.msk [vmem:[%s268] sm:$0x1] %vm267, %v266
    %s270 = scalar_lea.vmem %s1, 57
    %271 = vst.msk [vmem:[%s270] sm:$0x2] %vm267, %v266
    %s272 = scalar_lea.vmem %s1, 88
    %273 = vst.msk [vmem:[%s272] sm:$0x4] %vm267, %v266
    %v274 = vld [vmem:[#allocation0] sm:$0x7]
    %275 = vrot.lane.b32.xlu0 %v274, 101
    %v276 = vpop.permute.xlu0 %275
    %vm277 = vcmask 7168
    %s278 = scalar_lea.vmem %s1, 27
    %279 = vst.msk [vmem:[%s278] sm:$0x1] %vm277, %v276
    %s280 = scalar_lea.vmem %s1, 58
    %281 = vst.msk [vmem:[%s280] sm:$0x2] %vm277, %v276
    %s282 = scalar_lea.vmem %s1, 89
    %283 = vst.msk [vmem:[%s282] sm:$0x4] %vm277, %v276
    %v284 = vld [vmem:[#allocation0] sm:$0x7]
    %285 = vrot.lane.b32.xlu0 %v284, 100
    %v286 = vpop.permute.xlu0 %285
    %vm287 = vcmask 7168
    %s288 = scalar_lea.vmem %s1, 28
    %289 = vst.msk [vmem:[%s288] sm:$0x1] %vm287, %v286
    %s290 = scalar_lea.vmem %s1, 59
    %291 = vst.msk [vmem:[%s290] sm:$0x2] %vm287, %v286
    %s292 = scalar_lea.vmem %s1, 90
    %293 = vst.msk [vmem:[%s292] sm:$0x4] %vm287, %v286
    %v294 = vld [vmem:[#allocation0] sm:$0x7]
    %295 = vrot.lane.b32.xlu0 %v294, 99
    %v296 = vpop.permute.xlu0 %295
    %vm297 = vcmask 7168
    %s298 = scalar_lea.vmem %s1, 29
    %299 = vst.msk [vmem:[%s298] sm:$0x1] %vm297, %v296
    %s300 = scalar_lea.vmem %s1, 60
    %301 = vst.msk [vmem:[%s300] sm:$0x2] %vm297, %v296
    %s302 = scalar_lea.vmem %s1, 91
    %303 = vst.msk [vmem:[%s302] sm:$0x4] %vm297, %v296
    %v304 = vld [vmem:[#allocation0] sm:$0x7]
    %305 = vrot.lane.b32.xlu0 %v304, 98
    %v306 = vpop.permute.xlu0 %305
    %vm307 = vcmask 7168
    %s308 = scalar_lea.vmem %s1, 30
    %309 = vst.msk [vmem:[%s308] sm:$0x1] %vm307, %v306
    %s310 = scalar_lea.vmem %s1, 61
    %311 = vst.msk [vmem:[%s310] sm:$0x2] %vm307, %v306
    %s312 = scalar_lea.vmem %s1, 92
    %313 = vst.msk [vmem:[%s312] sm:$0x4] %vm307, %v306
    %v314 = vld [vmem:[#allocation0] sm:$0x7]
    %315 = vrot.lane.b32.xlu0 %v314, 97
    %v316 = vpop.permute.xlu0 %315
    %vm317 = vcmask 7168
    %s318 = scalar_lea.vmem %s1, 31
    %319 = vst.msk [vmem:[%s318] sm:$0x1] %vm317, %v316
    %s320 = scalar_lea.vmem %s1, 62
    %321 = vst.msk [vmem:[%s320] sm:$0x2] %vm317, %v316
    %s322 = scalar_lea.vmem %s1, 93
    %323 = vst.msk [vmem:[%s322] sm:$0x4] %vm317, %v316

// kernel: face_rotate_convolution.1
$region0: #{face_rotate_convolution.1}
  #allocation0 [shape = 'u32[]', space=smem, size = 0x4, offset = 0x4, fixed_abs, tag = 'smem constant byte address 0x4 - core index']
  #allocation1 [shape = 'u32[144,128]{1,0:T(1,128)}', space=vmem, size = 0x12000, scoped, tag = 'internal scratch']
  %s0 = inlined_call_operand.vmem [shape: f32[2,9,256], index: 0, kind: input, shape index: {}]
  %s1 = inlined_call_operand.vmem [shape: bf16[96,9], index: 1, kind: input, shape index: {}]
  %s2 = inlined_call_operand.vmem [shape: f32[96,1], index: 2, kind: input, shape index: {}]
  %s3 = inlined_call_operand.vmem [shape: bf16[96,96], index: 3, kind: input, shape index: {}]
  %s4 = inlined_call_operand.vmem [shape: f32[96,1], index: 4, kind: input, shape index: {}]
  %s5 = inlined_call_operand.vmem [shape: bf16[64,96], index: 5, kind: input, shape index: {}]
  %s6 = inlined_call_operand.vmem [shape: f32[64,1], index: 6, kind: input, shape index: {}]
  %s7 = inlined_call_operand.vmem [shape: bf16[64,64], index: 7, kind: input, shape index: {}]
  %s8 = inlined_call_operand.vmem [shape: f32[64,1], index: 8, kind: input, shape index: {}]
  %s9 = inlined_call_operand.hbm [shape: f32[2,64,256], index: 9, kind: output, shape index: {}]
  %s10 = sld [smem:[#allocation0]]
  $region69: #{face_rotate_convolution.1} parent=0
    _
  %s12 = ssub.s32 1, %s10
  %s13 = scalar_select 0, %s12, %s10
  $region1: #{face_rotate_convolution.1} parent=0
    #allocation2 [shape = 'u8[131072]{0}', space=vmem, size = 0x20000, scoped, tag = 'output window, operand 0']
    #allocation3 [shape = 's32[2]{0}', space=sflag, size = 0x8, scoped, tag = 'scoped memory for face_rotate_convolution.1']
    %14 = vsyncpa [#allocation3], 0
    %s15 = scalar_lea.sflag [#allocation3], 1
    %16 = vsyncpa %s15, 0
    loop: start=0, step=1, limit=4
    $region2: #{face_rotate_convolution.1} parent=1 // loop_pre_header
      _
    $region3: #{face_rotate_convolution.1} parent=1 // loop_header
      %s18 = sphi 0, %s22
      %p19 = scmp.ge.s32.totalorder %s18, 4
      %s25 = sphi 0, %s37
      %s26 = sphi 0, %s33
      %s27 = sphi 0, %s25
      %s28 = sphi 0, %s26
      %s29 = sphi 0, %s27
      %s30 = sphi 0, %s28
      %s42 = sphi 0, %s44
      %s45 = sphi 0, %s42
      %s46 = sphi 0, %s45
      %s62 = sphi 0, %s46
      %s66 = sphi 0, %s66
      %s68 = sphi 0, %s66
      %s69 = sphi 0, %s68
      %s83 = sphi 0, %s69
      %s87 = sphi 0, %s87
      %s89 = sphi 0, %s87
      %s90 = sphi 0, %s89
      %s104 = sphi 0, %s90
      %s108 = sphi 0, %s108
      %s110 = sphi 0, %s108
      %s111 = sphi 0, %s110
      %s125 = sphi 0, %s111
      %s129 = sphi 0, %s129
      %s131 = sphi 0, %s129
      %s132 = sphi 0, %s131
      %s146 = sphi 0, %s132
      %s150 = sphi 0, %s150
      %s152 = sphi 0, %s150
      %s153 = sphi 0, %s152
      %s167 = sphi 0, %s153
      %s171 = sphi 0, %s171
      %s173 = sphi 0, %s171
      %s174 = sphi 0, %s173
      %s188 = sphi 0, %s174
      %s192 = sphi 0, %s192
      %s194 = sphi 0, %s192
      %s195 = sphi 0, %s194
      %s209 = sphi 0, %s195
      %s213 = sphi 0, %s213
      %s215 = sphi 0, %s213
      %s216 = sphi 0, %s215
      %s230 = sphi 0, %s216
      %s238 = sphi 0, %s240
      %s241 = sphi 0, %s238
      %s242 = sphi 0, %s241
      %s258 = sphi 0, %s242
    $region4: #{face_rotate_convolution.1} parent=1 // loop_header_branch
      %21 = sbr.rel (%p19) target = $region8
    $region5: #{face_rotate_convolution.1} parent=1 // loop_body
      %s23 = ssub.s32 %s18, 1
      %s24 = ssub.s32 %s18, 2
      %s31 = sadd.s32 1, %s26
      %p32 = scmp.ge.s32.totalorder %s31, 1
      %s33 = scalar_select %p32, 0, %s31
      %s34 = sadd.s32 1, %s25
      %s35 = scalar_select %p32, %s34, %s25
      %p36 = scmp.ge.s32.totalorder %s35, 2
      %s37 = scalar_select %p36, 0, %s35
      %s38 = ssub.s32 %s25, %s37
      %s39 = ssub.s32 %s26, %s33
      %s40 = sor.u32 %s38, %s39
      %p41 = scmp.eq.s32.totalorder %s40, 0
      %s43 = sadd.s32 %s42, 1
      %s44 = scalar_select %p41, %s42, %s43
      %p47 = pneg %p41
      %p48 = scmp.eq.s32.totalorder %s18, 1
      %p49 = por %p47, %p48
      %p50 = scmp.ne.s32.totalorder %s42, %s45
      %p51 = scmp.eq.s32.totalorder %s18, 0
      %p52 = por %p50, %p51
      %p53 = scmp.ne.s32.totalorder %s42, %s45
      %p54 = scmp.eq.s32.totalorder %s23, 1
      %p55 = por %p53, %p54
      %p56 = scmp.ne.s32.totalorder %s45, %s46
      %p57 = scmp.eq.s32.totalorder %s23, 0
      %p58 = por %p56, %p57
      %p59 = scmp.ne.s32.totalorder %s45, %s46
      %p60 = scmp.eq.s32.totalorder %s24, 1
      %p61 = por %p59, %p60
      %p63 = scmp.ne.s32.totalorder %s46, %s62
      %p64 = scmp.eq.s32.totalorder %s24, 0
      %p65 = por %p63, %p64
      %s67 = sadd.s32 %s66, 1
      %p70 = scmp.eq.s32.totalorder %s18, 1
      %p71 = scmp.ne.s32.totalorder %s66, %s68
      %p72 = scmp.eq.s32.totalorder %s18, 0
      %p73 = por %p71, %p72
      %p74 = scmp.ne.s32.totalorder %s66, %s68
      %p75 = scmp.eq.s32.totalorder %s23, 1
      %p76 = por %p74, %p75
      %p77 = scmp.ne.s32.totalorder %s68, %s69
      %p78 = scmp.eq.s32.totalorder %s23, 0
      %p79 = por %p77, %p78
      %p80 = scmp.ne.s32.totalorder %s68, %s69
      %p81 = scmp.eq.s32.totalorder %s24, 1
      %p82 = por %p80, %p81
      %p84 = scmp.ne.s32.totalorder %s69, %s83
      %p85 = scmp.eq.s32.totalorder %s24, 0
      %p86 = por %p84, %p85
      %s88 = sadd.s32 %s87, 1
      %p91 = scmp.eq.s32.totalorder %s18, 1
      %p92 = scmp.ne.s32.totalorder %s87, %s89
      %p93 = scmp.eq.s32.totalorder %s18, 0
      %p94 = por %p92, %p93
      %p95 = scmp.ne.s32.totalorder %s87, %s89
      %p96 = scmp.eq.s32.totalorder %s23, 1
      %p97 = por %p95, %p96
      %p98 = scmp.ne.s32.totalorder %s89, %s90
      %p99 = scmp.eq.s32.totalorder %s23, 0
      %p100 = por %p98, %p99
      %p101 = scmp.ne.s32.totalorder %s89, %s90
      %p102 = scmp.eq.s32.totalorder %s24, 1
      %p103 = por %p101, %p102
      %p105 = scmp.ne.s32.totalorder %s90, %s104
      %p106 = scmp.eq.s32.totalorder %s24, 0
      %p107 = por %p105, %p106
      %s109 = sadd.s32 %s108, 1
      %p112 = scmp.eq.s32.totalorder %s18, 1
      %p113 = scmp.ne.s32.totalorder %s108, %s110
      %p114 = scmp.eq.s32.totalorder %s18, 0
      %p115 = por %p113, %p114
      %p116 = scmp.ne.s32.totalorder %s108, %s110
      %p117 = scmp.eq.s32.totalorder %s23, 1
      %p118 = por %p116, %p117
      %p119 = scmp.ne.s32.totalorder %s110, %s111
      %p120 = scmp.eq.s32.totalorder %s23, 0
      %p121 = por %p119, %p120
      %p122 = scmp.ne.s32.totalorder %s110, %s111
      %p123 = scmp.eq.s32.totalorder %s24, 1
      %p124 = por %p122, %p123
      %p126 = scmp.ne.s32.totalorder %s111, %s125
      %p127 = scmp.eq.s32.totalorder %s24, 0
      %p128 = por %p126, %p127
      %s130 = sadd.s32 %s129, 1
      %p133 = scmp.eq.s32.totalorder %s18, 1
      %p134 = scmp.ne.s32.totalorder %s129, %s131
      %p135 = scmp.eq.s32.totalorder %s18, 0
      %p136 = por %p134, %p135
      %p137 = scmp.ne.s32.totalorder %s129, %s131
      %p138 = scmp.eq.s32.totalorder %s23, 1
      %p139 = por %p137, %p138
      %p140 = scmp.ne.s32.totalorder %s131, %s132
      %p141 = scmp.eq.s32.totalorder %s23, 0
      %p142 = por %p140, %p141
      %p143 = scmp.ne.s32.totalorder %s131, %s132
      %p144 = scmp.eq.s32.totalorder %s24, 1
      %p145 = por %p143, %p144
      %p147 = scmp.ne.s32.totalorder %s132, %s146
      %p148 = scmp.eq.s32.totalorder %s24, 0
      %p149 = por %p147, %p148
      %s151 = sadd.s32 %s150, 1
      %p154 = scmp.eq.s32.totalorder %s18, 1
      %p155 = scmp.ne.s32.totalorder %s150, %s152
      %p156 = scmp.eq.s32.totalorder %s18, 0
      %p157 = por %p155, %p156
      %p158 = scmp.ne.s32.totalorder %s150, %s152
      %p159 = scmp.eq.s32.totalorder %s23, 1
      %p160 = por %p158, %p159
      %p161 = scmp.ne.s32.totalorder %s152, %s153
      %p162 = scmp.eq.s32.totalorder %s23, 0
      %p163 = por %p161, %p162
      %p164 = scmp.ne.s32.totalorder %s152, %s153
      %p165 = scmp.eq.s32.totalorder %s24, 1
      %p166 = por %p164, %p165
      %p168 = scmp.ne.s32.totalorder %s153, %s167
      %p169 = scmp.eq.s32.totalorder %s24, 0
      %p170 = por %p168, %p169
      %s172 = sadd.s32 %s171, 1
      %p175 = scmp.eq.s32.totalorder %s18, 1
      %p176 = scmp.ne.s32.totalorder %s171, %s173
      %p177 = scmp.eq.s32.totalorder %s18, 0
      %p178 = por %p176, %p177
      %p179 = scmp.ne.s32.totalorder %s171, %s173
      %p180 = scmp.eq.s32.totalorder %s23, 1
      %p181 = por %p179, %p180
      %p182 = scmp.ne.s32.totalorder %s173, %s174
      %p183 = scmp.eq.s32.totalorder %s23, 0
      %p184 = por %p182, %p183
      %p185 = scmp.ne.s32.totalorder %s173, %s174
      %p186 = scmp.eq.s32.totalorder %s24, 1
      %p187 = por %p185, %p186
      %p189 = scmp.ne.s32.totalorder %s174, %s188
      %p190 = scmp.eq.s32.totalorder %s24, 0
      %p191 = por %p189, %p190
      %s193 = sadd.s32 %s192, 1
      %p196 = scmp.eq.s32.totalorder %s18, 1
      %p197 = scmp.ne.s32.totalorder %s192, %s194
      %p198 = scmp.eq.s32.totalorder %s18, 0
      %p199 = por %p197, %p198
      %p200 = scmp.ne.s32.totalorder %s192, %s194
      %p201 = scmp.eq.s32.totalorder %s23, 1
      %p202 = por %p200, %p201
      %p203 = scmp.ne.s32.totalorder %s194, %s195
      %p204 = scmp.eq.s32.totalorder %s23, 0
      %p205 = por %p203, %p204
      %p206 = scmp.ne.s32.totalorder %s194, %s195
      %p207 = scmp.eq.s32.totalorder %s24, 1
      %p208 = por %p206, %p207
      %p210 = scmp.ne.s32.totalorder %s195, %s209
      %p211 = scmp.eq.s32.totalorder %s24, 0
      %p212 = por %p210, %p211
      %s214 = sadd.s32 %s213, 1
      %p217 = scmp.eq.s32.totalorder %s18, 1
      %p218 = scmp.ne.s32.totalorder %s213, %s215
      %p219 = scmp.eq.s32.totalorder %s18, 0
      %p220 = por %p218, %p219
      %p221 = scmp.ne.s32.totalorder %s213, %s215
      %p222 = scmp.eq.s32.totalorder %s23, 1
      %p223 = por %p221, %p222
      %p224 = scmp.ne.s32.totalorder %s215, %s216
      %p225 = scmp.eq.s32.totalorder %s23, 0
      %p226 = por %p224, %p225
      %p227 = scmp.ne.s32.totalorder %s215, %s216
      %p228 = scmp.eq.s32.totalorder %s24, 1
      %p229 = por %p227, %p228
      %p231 = scmp.ne.s32.totalorder %s216, %s230
      %p232 = scmp.eq.s32.totalorder %s24, 0
      %p233 = por %p231, %p232
      %s234 = ssub.s32 %s25, %s37
      %s235 = ssub.s32 %s26, %s33
      %s236 = sor.u32 %s234, %s235
      %p237 = scmp.eq.s32.totalorder %s236, 0
      %s239 = sadd.s32 %s238, 1
      %s240 = scalar_select %p237, %s238, %s239
      %p243 = pneg %p237
      %p244 = scmp.eq.s32.totalorder %s18, 1
      %p245 = por %p243, %p244
      %p246 = scmp.ne.s32.totalorder %s238, %s241
      %p247 = scmp.eq.s32.totalorder %s18, 0
      %p248 = por %p246, %p247
      %p249 = scmp.ne.s32.totalorder %s238, %s241
      %p250 = scmp.eq.s32.totalorder %s23, 1
      %p251 = por %p249, %p250
      %p252 = scmp.ne.s32.totalorder %s241, %s242
      %p253 = scmp.eq.s32.totalorder %s23, 0
      %p254 = por %p252, %p253
      %p255 = scmp.ne.s32.totalorder %s241, %s242
      %p256 = scmp.eq.s32.totalorder %s24, 1
      %p257 = por %p255, %p256
      %p259 = scmp.ne.s32.totalorder %s242, %s258
      %p260 = scmp.eq.s32.totalorder %s24, 0
      %p261 = por %p259, %p260
      %p262 = scmp.le.s32.totalorder 1, %s18
      %p263 = scmp.lt.s32.totalorder %s18, 3
      %p264 = pnand %p262, %p263
      %p265 = pneg %p264
      // Predicated region
      $region9: #{face_rotate_convolution.1} parent=5 // pred_check
        _
      $region10: #{face_rotate_convolution.1} parent=5 // pred_check_branch
        %267 = sbr.rel (%p264) target = $region12
      $region11: #{face_rotate_convolution.1} parent=5 // pred_region
        %s268 = ssub.s32 %s18, 1
        // Predicated region
        $region13: #{face_rotate_convolution.1} parent=11 // pred_check
          %p269 = pneg %p79
        $region14: #{face_rotate_convolution.1} parent=11 // pred_check_branch
          %271 = sbr.rel (%p269) target = $region16
        $region15: #{face_rotate_convolution.1} parent=11 // pred_region
          _
        $region16: #{face_rotate_convolution.1} parent=11 // pred_fallthru
          _
        // Predicated region
        $region17: #{face_rotate_convolution.1} parent=11 // pred_check
          %p272 = pneg %p100
        $region18: #{face_rotate_convolution.1} parent=11 // pred_check_branch
          %274 = sbr.rel (%p272) target = $region20
        $region19: #{face_rotate_convolution.1} parent=11 // pred_region
          _
        $region20: #{face_rotate_convolution.1} parent=11 // pred_fallthru
          _
        // Predicated region
        $region21: #{face_rotate_convolution.1} parent=11 // pred_check
          %p275 = pneg %p121
        $region22: #{face_rotate_convolution.1} parent=11 // pred_check_branch
          %277 = sbr.rel (%p275) target = $region24
        $region23: #{face_rotate_convolution.1} parent=11 // pred_region
          _
        $region24: #{face_rotate_convolution.1} parent=11 // pred_fallthru
          _
        // Predicated region
        $region25: #{face_rotate_convolution.1} parent=11 // pred_check
          %p278 = pneg %p142
        $region26: #{face_rotate_convolution.1} parent=11 // pred_check_branch
          %280 = sbr.rel (%p278) target = $region28
        $region27: #{face_rotate_convolution.1} parent=11 // pred_region
          _
        $region28: #{face_rotate_convolution.1} parent=11 // pred_fallthru
          _
        // Predicated region
        $region29: #{face_rotate_convolution.1} parent=11 // pred_check
          %p281 = pneg %p163
        $region30: #{face_rotate_convolution.1} parent=11 // pred_check_branch
          %283 = sbr.rel (%p281) target = $region32
        $region31: #{face_rotate_convolution.1} parent=11 // pred_region
          _
        $region32: #{face_rotate_convolution.1} parent=11 // pred_fallthru
          _
        // Predicated region
        $region33: #{face_rotate_convolution.1} parent=11 // pred_check
          %p284 = pneg %p184
        $region34: #{face_rotate_convolution.1} parent=11 // pred_check_branch
          %286 = sbr.rel (%p284) target = $region36
        $region35: #{face_rotate_convolution.1} parent=11 // pred_region
          _
        $region36: #{face_rotate_convolution.1} parent=11 // pred_fallthru
          _
        // Predicated region
        $region37: #{face_rotate_convolution.1} parent=11 // pred_check
          %p287 = pneg %p205
        $region38: #{face_rotate_convolution.1} parent=11 // pred_check_branch
          %289 = sbr.rel (%p287) target = $region40
        $region39: #{face_rotate_convolution.1} parent=11 // pred_region
          _
        $region40: #{face_rotate_convolution.1} parent=11 // pred_fallthru
          _
        // Predicated region
        $region41: #{face_rotate_convolution.1} parent=11 // pred_check
          %p290 = pneg %p226
        $region42: #{face_rotate_convolution.1} parent=11 // pred_check_branch
          %292 = sbr.rel (%p290) target = $region44
        $region43: #{face_rotate_convolution.1} parent=11 // pred_region
          _
        $region44: #{face_rotate_convolution.1} parent=11 // pred_fallthru
          _
      $region12: #{face_rotate_convolution.1} parent=5 // pred_fallthru
        _
      %p293 = scmp.lt.s32.totalorder %s18, 2
      // Predicated region
      $region45: #{face_rotate_convolution.1} parent=5 // pred_check
        %p294 = pneg %p293
      $region46: #{face_rotate_convolution.1} parent=5 // pred_check_branch
        %296 = sbr.rel (%p294) target = $region48
      $region47: #{face_rotate_convolution.1} parent=5 // pred_region
        // Predicated region
        $region49: #{face_rotate_convolution.1} parent=47 // pred_check
          %p297 = pneg %p52
        $region50: #{face_rotate_convolution.1} parent=47 // pred_check_branch
          %299 = sbr.rel (%p297) target = $region52
        $region51: #{face_rotate_convolution.1} parent=47 // pred_region
          %s300 = smul.u32 2, %s26
          %p301 = scmp.lt.s32.totalorder %s25, 1
          %s302 = scalar_select %p301, %s25, 1
          %p303 = scmp.lt.s32.totalorder %s300, 1
          %s304 = scalar_select %p303, %s300, 1
          %s305 = smul.addr %s302, 4
          %s306 = sadd.s32 %s304, %s305
          %s307 = smul.addr %s306, 8
          %s308 = scalar_lea.vmem %s0, %s307
          %s309 = smul.u32 2, %s26
        $region52: #{face_rotate_convolution.1} parent=47 // pred_fallthru
          _
      $region48: #{face_rotate_convolution.1} parent=5 // pred_fallthru
        _
      %p310 = scmp.le.s32.totalorder 1, %s18
      %p311 = scmp.lt.s32.totalorder %s18, 3
      %p312 = pnand %p310, %p311
      %p313 = pneg %p312
      // Predicated region
      $region53: #{face_rotate_convolution.1} parent=5 // pred_check
        _
      $region54: #{face_rotate_convolution.1} parent=5 // pred_check_branch
        %315 = sbr.rel (%p312) target = $region56
      $region55: #{face_rotate_convolution.1} parent=5 // pred_region
        %s316 = ssub.s32 %s18, 1
        %s317 = smul.u32 2, %s28
        %p318 = scmp.lt.s32.totalorder %s27, 1
        %s319 = scalar_select %p318, %s27, 1
        %p320 = scmp.lt.s32.totalorder %s317, 1
        %s321 = scalar_select %p320, %s317, 1
        %s322 = smul.addr %s319, 4
        %s323 = sadd.s32 %s321, %s322
        %s324 = smul.addr %s323, 8
        %s325 = scalar_lea.vmem %s0, %s324
        %p326 = pneg %p58
        %p327 = pneg %p55
        %p328 = pneg %p79
        %p329 = pneg %p76
        %p330 = pneg %p100
        %p331 = pneg %p97
        %p332 = pneg %p121
        %p333 = pneg %p118
        %p334 = pneg %p142
        %p335 = pneg %p139
        %p336 = pneg %p163
        %p337 = pneg %p160
        %p338 = pneg %p184
        %p339 = pneg %p181
        %p340 = pneg %p205
        %p341 = pneg %p202
        %p342 = pneg %p226
        %p343 = pneg %p223
        %p344 = pneg %p254
        %p345 = pneg %p251
        %s346 = sand.u32 %s241, 1
        %s347 = scalar_lea.sflag [#allocation3], %s346
        %s348 = sand.u32 %s241, 1
        %s349 = smul.addr %s348, 128
        %s350 = scalar_lea.vmem [#allocation2], %s349
        %s351 = smul.u32 2, %s28
        %p352 = scmp.lt.s32.totalorder %s27, 1
        %s353 = scalar_select %p352, %s27, 1
        %p354 = scmp.lt.s32.totalorder %s351, 1
        %s355 = scalar_select %p354, %s351, 1
        %s356 = smul.addr %s353, 4
        %s357 = sadd.s32 %s355, %s356
        %s358 = smul.addr %s357, 8
        %s359 = scalar_lea.vmem %s0, %s358
        %s360 = smul.u32 2, %s28
        %s361 = smul.u32 2, %s28
        %v363 = vld [vmem:[%s1] sm:$0xf]
        %v364 = vld [vmem:[%s1 + $0x4] sm:$0xf]
        %v365 = vld [vmem:[%s1 + $0x8] sm:$0xf]
        %v366 = vld [vmem:[%s1 + $0xc] sm:$0xf]
        %v367 = vld [vmem:[%s1 + $0x10] sm:$0xf]
        %v368 = vld [vmem:[%s1 + $0x14] sm:$0xf]
        %v369 = vld [vmem:[%s1 + $0x18] sm:$0xf]
        %v370 = vld [vmem:[%s1 + $0x1c] sm:$0xf]
        %v371 = vld [vmem:[%s1 + $0x20] sm:$0xf]
        %v372 = vld [vmem:[%s1 + $0x24] sm:$0xf]
        %v373 = vld [vmem:[%s1 + $0x28] sm:$0xf]
        %v374 = vld [vmem:[%s1 + $0x2c] sm:$0xf]
        %v375 = vld [vmem:[%s3] sm:$0xf]
        %v376 = vld [vmem:[%s3 + $0x4] sm:$0xf]
        %v377 = vld [vmem:[%s3 + $0x8] sm:$0xf]
        %v378 = vld [vmem:[%s3 + $0xc] sm:$0xf]
        %v379 = vld [vmem:[%s3 + $0x10] sm:$0xf]
        %v380 = vld [vmem:[%s3 + $0x14] sm:$0xf]
        %v381 = vld [vmem:[%s3 + $0x18] sm:$0xf]
        %v382 = vld [vmem:[%s3 + $0x1c] sm:$0xf]
        %v383 = vld [vmem:[%s3 + $0x20] sm:$0xf]
        %v384 = vld [vmem:[%s3 + $0x24] sm:$0xf]
        %v385 = vld [vmem:[%s3 + $0x28] sm:$0xf]
        %v386 = vld [vmem:[%s3 + $0x2c] sm:$0xf]
        %v387 = vld [vmem:[%s5] sm:$0xf]
        %v388 = vld [vmem:[%s5 + $0x4] sm:$0xf]
        %v389 = vld [vmem:[%s5 + $0x8] sm:$0xf]
        %v390 = vld [vmem:[%s5 + $0xc] sm:$0xf]
        %v391 = vld [vmem:[%s5 + $0x10] sm:$0xf]
        %v392 = vld [vmem:[%s5 + $0x14] sm:$0xf]
        %v393 = vld [vmem:[%s5 + $0x18] sm:$0xf]
        %v394 = vld [vmem:[%s5 + $0x1c] sm:$0xf]
        %v395 = vld [vmem:[%s7] sm:$0xf]
        %v396 = vld [vmem:[%s7 + $0x4] sm:$0xf]
        %v397 = vld [vmem:[%s7 + $0x8] sm:$0xf]
        %v398 = vld [vmem:[%s7 + $0xc] sm:$0xf]
        %v399 = vld [vmem:[%s7 + $0x10] sm:$0xf]
        %v400 = vld [vmem:[%s7 + $0x14] sm:$0xf]
        %v401 = vld [vmem:[%s7 + $0x18] sm:$0xf]
        %v402 = vld [vmem:[%s7 + $0x1c] sm:$0xf]
        %v403 = vld [vmem:[%s2] sm:$0xff]
        %v404 = vld [vmem:[%s2 + $0x8] sm:$0xff]
        %v405 = vld [vmem:[%s2 + $0x10] sm:$0xff]
        %v406 = vld [vmem:[%s2 + $0x18] sm:$0xff]
        %v407 = vld [vmem:[%s2 + $0x20] sm:$0xff]
        %v408 = vld [vmem:[%s2 + $0x28] sm:$0xff]
        %v409 = vld [vmem:[%s2 + $0x30] sm:$0xff]
        %v410 = vld [vmem:[%s2 + $0x38] sm:$0xff]
        %v411 = vld [vmem:[%s2 + $0x40] sm:$0xff]
        %v412 = vld [vmem:[%s2 + $0x48] sm:$0xff]
        %v413 = vld [vmem:[%s2 + $0x50] sm:$0xff]
        %v414 = vld [vmem:[%s2 + $0x58] sm:$0xff]
        %v415 = vld [vmem:[%s4] sm:$0xff]
        %v416 = vld [vmem:[%s4 + $0x8] sm:$0xff]
        %v417 = vld [vmem:[%s4 + $0x10] sm:$0xff]
        %v418 = vld [vmem:[%s4 + $0x18] sm:$0xff]
        %v419 = vld [vmem:[%s4 + $0x20] sm:$0xff]
        %v420 = vld [vmem:[%s4 + $0x28] sm:$0xff]
        %v421 = vld [vmem:[%s4 + $0x30] sm:$0xff]
        %v422 = vld [vmem:[%s4 + $0x38] sm:$0xff]
        %v423 = vld [vmem:[%s4 + $0x40] sm:$0xff]
        %v424 = vld [vmem:[%s4 + $0x48] sm:$0xff]
        %v425 = vld [vmem:[%s4 + $0x50] sm:$0xff]
        %v426 = vld [vmem:[%s4 + $0x58] sm:$0xff]
        %v427 = vld [vmem:[%s6] sm:$0xff]
        %v428 = vld [vmem:[%s6 + $0x8] sm:$0xff]
        %v429 = vld [vmem:[%s6 + $0x10] sm:$0xff]
        %v430 = vld [vmem:[%s6 + $0x18] sm:$0xff]
        %v431 = vld [vmem:[%s6 + $0x20] sm:$0xff]
        %v432 = vld [vmem:[%s6 + $0x28] sm:$0xff]
        %v433 = vld [vmem:[%s6 + $0x30] sm:$0xff]
        %v434 = vld [vmem:[%s6 + $0x38] sm:$0xff]
        %v435 = vld [vmem:[%s8] sm:$0xff]
        %v436 = vld [vmem:[%s8 + $0x8] sm:$0xff]
        %v437 = vld [vmem:[%s8 + $0x10] sm:$0xff]
        %v438 = vld [vmem:[%s8 + $0x18] sm:$0xff]
        %v439 = vld [vmem:[%s8 + $0x20] sm:$0xff]
        %v440 = vld [vmem:[%s8 + $0x28] sm:$0xff]
        %v441 = vld [vmem:[%s8 + $0x30] sm:$0xff]
        %v442 = vld [vmem:[%s8 + $0x38] sm:$0xff]
        %v443 = vld [vmem:[%s359] sm:$0xff]
        %v444 = vld [vmem:[%s359 + $0x8] sm:$0xff]
        %v445 = vld [vmem:[%s359 + $0x10] sm:$0x1]
        %v446 = vld [vmem:[%s359 + $0x18] sm:$0x1]
        %v447 = vpack.c.bf16 %v445, %v443
        %v448 = vpack.c.bf16 %v446, %v444
        %450 = vset.pattern.permute.xlu0 0
        %451 = vperm.xlu0 %450, %v403
        %v452 = vpop.permute.xlu0 %451
        %455 = vset.pattern.permute.xlu0 0
        %456 = vperm.xlu0 %455, %v404
        %v457 = vpop.permute.xlu0 %456
        %460 = vset.pattern.permute.xlu0 0
        %461 = vperm.xlu0 %460, %v405
        %v462 = vpop.permute.xlu0 %461
        %465 = vset.pattern.permute.xlu0 0
        %466 = vperm.xlu0 %465, %v406
        %v467 = vpop.permute.xlu0 %466
        %470 = vset.pattern.permute.xlu0 0
        %471 = vperm.xlu0 %470, %v407
        %v472 = vpop.permute.xlu0 %471
        %475 = vset.pattern.permute.xlu0 0
        %476 = vperm.xlu0 %475, %v408
        %v477 = vpop.permute.xlu0 %476
        %480 = vset.pattern.permute.xlu0 0
        %481 = vperm.xlu0 %480, %v409
        %v482 = vpop.permute.xlu0 %481
        %485 = vset.pattern.permute.xlu0 0
        %486 = vperm.xlu0 %485, %v410
        %v487 = vpop.permute.xlu0 %486
        %490 = vset.pattern.permute.xlu0 0
        %491 = vperm.xlu0 %490, %v411
        %v492 = vpop.permute.xlu0 %491
        %495 = vset.pattern.permute.xlu0 0
        %496 = vperm.xlu0 %495, %v412
        %v497 = vpop.permute.xlu0 %496
        %500 = vset.pattern.permute.xlu0 0
        %501 = vperm.xlu0 %500, %v413
        %v502 = vpop.permute.xlu0 %501
        %505 = vset.pattern.permute.xlu0 0
        %506 = vperm.xlu0 %505, %v414
        %v507 = vpop.permute.xlu0 %506
        %v521 = vunpack.c.l.b16 %v363
        %v522 = vunpack.c.l.b16 %v364
        %v523 = vunpack.c.l.b16 %v365
        %v524 = vunpack.c.l.b16 %v366
        %v525 = vunpack.c.l.b16 %v367
        %v526 = vunpack.c.l.b16 %v368
        %v527 = vunpack.c.l.b16 %v369
        %v528 = vunpack.c.l.b16 %v370
        %v529 = vunpack.c.l.b16 %v371
        %v530 = vunpack.c.l.b16 %v372
        %v531 = vunpack.c.l.b16 %v373
        %v532 = vunpack.c.l.b16 %v374
        %v533 = vpack.c.b16 %v522, %v521
        %v534 = vpack.c.b16 %v524, %v523
        %v535 = vpack.c.b16 %v526, %v525
        %v536 = vpack.c.b16 %v528, %v527
        %v537 = vpack.c.b16 %v530, %v529
        %v538 = vpack.c.b16 %v532, %v531
        %vm539 = vcmask 72704
        %v541 = vsel %vm539, %v533, 0
        %v544 = vsel %vm539, %v534, 0
        %v547 = vsel %vm539, %v535, 0
        %v550 = vsel %vm539, %v536, 0
        %v553 = vsel %vm539, %v537, 0
        %v556 = vsel %vm539, %v538, 0
        %vm558 = vcmask 1043456
        %vm559 = vcmask 1044480
        %v560 = vsel %vm558, 4294967295, 65535
        %v561 = vsel %vm559, %v560, 0
        %v563 = vand.u32 %v447, %v561
        %v566 = vand.u32 %v448, %v561
        %568 = vmatprep.subr.bf16.mxu0 0
        %569 = vmatpush1.bf16.msra.mxu0 0
        %570 = vmatprep.subr.bf16.mxu0 0
        %571 = vmatpush1.bf16.msra.mxu0 0
        %572 = vmatprep.subr.bf16.mxu0 0
        %573 = vmatpush1.bf16.msra.mxu0 0
        %574 = vmatprep.subr.bf16.mxu0 0
        %575 = vmatpush1.bf16.msra.mxu0 0
        %576 = vmatprep.subr.bf16.mxu0 0
        %577 = vmatpush1.bf16.msra.mxu0 0
        %578 = vmatprep.subr.bf16.mxu0 0
        %579 = vmatpush1.bf16.msra.mxu0 0
        %580 = vmatprep.subr.bf16.mxu0 0
        %581 = vmatpush1.bf16.msra.mxu0 0
        %582 = vmatprep.subr.bf16.mxu0 %v566
        %583 = vmatpush1.bf16.msra.mxu0 %v563
        %584 = vmatprep.subr.bf16.mxu0 0
        %585 = vmatpush2.bf16.msra.mxu0 0
        %586 = vmatprep.subr.bf16.mxu0 0
        %587 = vmatpush2.bf16.msra.mxu0 0
        %588 = vmatprep.subr.bf16.mxu0 0
        %589 = vmatpush2.bf16.msra.mxu0 0
        %590 = vmatprep.subr.bf16.mxu0 0
        %591 = vmatpush2.bf16.msra.mxu0 0
        %592 = vmatprep.subr.bf16.mxu0 0
        %593 = vmatpush2.bf16.msra.mxu0 0
        %594 = vmatprep.subr.bf16.mxu0 0
        %595 = vmatpush2.bf16.msra.mxu0 0
        %596 = vmatprep.subr.bf16.mxu0 0
        %597 = vmatpush2.bf16.msra.mxu0 0
        %598 = vmatprep.subr.bf16.mxu0 0
        %599 = vmatpush2.bf16.msra.mxu0 0
        %600 = vmatprep.mubr.bf16.mxu0 0
        %601 = vmatmul.mubr.bf16.gmra.mxu0 %v541
        %v602 = vpop.f32.mrf.mxu0
        %v603 = vadd.f32 %v452, %v602
        %v604 = vpop.f32.mrf.mxu0
        %v605 = vadd.f32 %v452, %v604
        %v606 = vpop.f32.mrf.mxu0
        %v607 = vadd.f32 %v457, %v606
        %v608 = vpop.f32.mrf.mxu0
        %v609 = vadd.f32 %v457, %v608
        %610 = vmatprep.mubr.bf16.mxu0 0
        %611 = vmatmul.mubr.bf16.gmra.mxu0 %v544
        %v612 = vpop.f32.mrf.mxu0
        %v613 = vadd.f32 %v462, %v612
        %v614 = vpop.f32.mrf.mxu0
        %v615 = vadd.f32 %v462, %v614
        %v616 = vpop.f32.mrf.mxu0
        %v617 = vadd.f32 %v467, %v616
        %v618 = vpop.f32.mrf.mxu0
        %v619 = vadd.f32 %v467, %v618
        %620 = vmatprep.mubr.bf16.mxu0 0
        %621 = vmatmul.mubr.bf16.gmra.mxu0 %v547
        %v622 = vpop.f32.mrf.mxu0
        %v623 = vadd.f32 %v472, %v622
        %v624 = vpop.f32.mrf.mxu0
        %v625 = vadd.f32 %v472, %v624
        %v626 = vpop.f32.mrf.mxu0
        %v627 = vadd.f32 %v477, %v626
        %v628 = vpop.f32.mrf.mxu0
        %v629 = vadd.f32 %v477, %v628
        %630 = vmatprep.mubr.bf16.mxu0 0
        %631 = vmatmul.mubr.bf16.gmra.mxu0 %v550
        %v632 = vpop.f32.mrf.mxu0
        %v633 = vadd.f32 %v482, %v632
        %v634 = vpop.f32.mrf.mxu0
        %v635 = vadd.f32 %v482, %v634
        %v636 = vpop.f32.mrf.mxu0
        %v637 = vadd.f32 %v487, %v636
        %v638 = vpop.f32.mrf.mxu0
        %v639 = vadd.f32 %v487, %v638
        %640 = vmatprep.mubr.bf16.mxu0 0
        %641 = vmatmul.mubr.bf16.gmra.mxu0 %v553
        %v642 = vpop.f32.mrf.mxu0
        %v643 = vadd.f32 %v492, %v642
        %v644 = vpop.f32.mrf.mxu0
        %v645 = vadd.f32 %v492, %v644
        %v646 = vpop.f32.mrf.mxu0
        %v647 = vadd.f32 %v497, %v646
        %v648 = vpop.f32.mrf.mxu0
        %v649 = vadd.f32 %v497, %v648
        %650 = vmatprep.mubr.bf16.mxu0 0
        %651 = vmatmul.mubr.bf16.gmra.mxu0 %v556
        %v652 = vpop.f32.mrf.mxu0
        %v653 = vadd.f32 %v502, %v652
        %v654 = vpop.f32.mrf.mxu0
        %v655 = vadd.f32 %v502, %v654
        %v656 = vpop.f32.mrf.mxu0
        %v657 = vadd.f32 %v507, %v656
        %v658 = vpop.f32.mrf.mxu0
        %v659 = vadd.f32 %v507, %v658
        %660 = vdwg.mxu0
        %v661 = vmax.f32 %v603, 0.0
        %v662 = vmax.f32 %v605, 0.0
        %v663 = vmax.f32 %v607, 0.0
        %v664 = vmax.f32 %v609, 0.0
        %v665 = vmax.f32 %v613, 0.0
        %v666 = vmax.f32 %v615, 0.0
        %v667 = vmax.f32 %v617, 0.0
        %v668 = vmax.f32 %v619, 0.0
        %v669 = vmax.f32 %v623, 0.0
        %v670 = vmax.f32 %v625, 0.0
        %v671 = vmax.f32 %v627, 0.0
        %v672 = vmax.f32 %v629, 0.0
        %v673 = vmax.f32 %v633, 0.0
        %v674 = vmax.f32 %v635, 0.0
        %v675 = vmax.f32 %v637, 0.0
        %v676 = vmax.f32 %v639, 0.0
        %v677 = vmax.f32 %v643, 0.0
        %v678 = vmax.f32 %v645, 0.0
        %v679 = vmax.f32 %v647, 0.0
        %v680 = vmax.f32 %v649, 0.0
        %v681 = vmax.f32 %v653, 0.0
        %v682 = vmax.f32 %v655, 0.0
        %v683 = vmax.f32 %v657, 0.0
        %v684 = vmax.f32 %v659, 0.0
        %v685 = vpack.c.bf16 %v663, %v661
        %v686 = vpack.c.bf16 %v664, %v662
        %v687 = vpack.c.bf16 %v667, %v665
        %v688 = vpack.c.bf16 %v668, %v666
        %v689 = vpack.c.bf16 %v671, %v669
        %v690 = vpack.c.bf16 %v672, %v670
        %v691 = vpack.c.bf16 %v675, %v673
        %v692 = vpack.c.bf16 %v676, %v674
        %v693 = vpack.c.bf16 %v679, %v677
        %v694 = vpack.c.bf16 %v680, %v678
        %v695 = vpack.c.bf16 %v683, %v681
        %v696 = vpack.c.bf16 %v684, %v682
        %698 = vset.pattern.permute.xlu0 0
        %699 = vperm.xlu0 %698, %v415
        %v700 = vpop.permute.xlu0 %699
        %703 = vset.pattern.permute.xlu0 0
        %704 = vperm.xlu0 %703, %v416
        %v705 = vpop.permute.xlu0 %704
        %708 = vset.pattern.permute.xlu0 0
        %709 = vperm.xlu0 %708, %v417
        %v710 = vpop.permute.xlu0 %709
        %713 = vset.pattern.permute.xlu0 0
        %714 = vperm.xlu0 %713, %v418
        %v715 = vpop.permute.xlu0 %714
        %718 = vset.pattern.permute.xlu0 0
        %719 = vperm.xlu0 %718, %v419
        %v720 = vpop.permute.xlu0 %719
        %723 = vset.pattern.permute.xlu0 0
        %724 = vperm.xlu0 %723, %v420
        %v725 = vpop.permute.xlu0 %724
        %728 = vset.pattern.permute.xlu0 0
        %729 = vperm.xlu0 %728, %v421
        %v730 = vpop.permute.xlu0 %729
        %733 = vset.pattern.permute.xlu0 0
        %734 = vperm.xlu0 %733, %v422
        %v735 = vpop.permute.xlu0 %734
        %738 = vset.pattern.permute.xlu0 0
        %739 = vperm.xlu0 %738, %v423
        %v740 = vpop.permute.xlu0 %739
        %743 = vset.pattern.permute.xlu0 0
        %744 = vperm.xlu0 %743, %v424
        %v745 = vpop.permute.xlu0 %744
        %748 = vset.pattern.permute.xlu0 0
        %749 = vperm.xlu0 %748, %v425
        %v750 = vpop.permute.xlu0 %749
        %753 = vset.pattern.permute.xlu0 0
        %754 = vperm.xlu0 %753, %v426
        %v755 = vpop.permute.xlu0 %754
        %v769 = vunpack.c.l.b16 %v375
        %v770 = vunpack.c.l.b16 %v376
        %v771 = vunpack.c.l.b16 %v377
        %v772 = vunpack.c.l.b16 %v378
        %v773 = vunpack.c.l.b16 %v379
        %v774 = vunpack.c.l.b16 %v380
        %v775 = vunpack.c.l.b16 %v381
        %v776 = vunpack.c.l.b16 %v382
        %v777 = vunpack.c.l.b16 %v383
        %v778 = vunpack.c.l.b16 %v384
        %v779 = vunpack.c.l.b16 %v385
        %v780 = vunpack.c.l.b16 %v386
        %v781 = vpack.c.b16 %v770, %v769
        %v782 = vpack.c.b16 %v772, %v771
        %v783 = vpack.c.b16 %v774, %v773
        %v784 = vpack.c.b16 %v776, %v775
        %v785 = vpack.c.b16 %v778, %v777
        %v786 = vpack.c.b16 %v780, %v779
        %vm787 = vcmask 785408
        %v789 = vsel %vm787, %v781, 0
        %v792 = vsel %vm787, %v782, 0
        %v795 = vsel %vm787, %v783, 0
        %v798 = vsel %vm787, %v784, 0
        %v801 = vsel %vm787, %v785, 0
        %v804 = vsel %vm787, %v786, 0
        %806 = vmatprep.subr.bf16.mxu0 0
        %807 = vmatpush1.bf16.msra.mxu0 0
        %808 = vmatprep.subr.bf16.mxu0 0
        %809 = vmatpush1.bf16.msra.mxu0 0
        %810 = vmatprep.subr.bf16.mxu0 %v696
        %811 = vmatpush1.bf16.msra.mxu0 %v695
        %812 = vmatprep.subr.bf16.mxu0 %v694
        %813 = vmatpush1.bf16.msra.mxu0 %v693
        %814 = vmatprep.subr.bf16.mxu0 %v692
        %815 = vmatpush1.bf16.msra.mxu0 %v691
        %816 = vmatprep.subr.bf16.mxu0 %v690
        %817 = vmatpush1.bf16.msra.mxu0 %v689
        %818 = vmatprep.subr.bf16.mxu0 %v688
        %819 = vmatpush1.bf16.msra.mxu0 %v687
        %820 = vmatprep.subr.bf16.mxu0 %v686
        %821 = vmatpush1.bf16.msra.mxu0 %v685
        %822 = vmatprep.subr.bf16.mxu0 0
        %823 = vmatpush2.bf16.msra.mxu0 0
        %824 = vmatprep.subr.bf16.mxu0 0
        %825 = vmatpush2.bf16.msra.mxu0 0
        %826 = vmatprep.subr.bf16.mxu0 0
        %827 = vmatpush2.bf16.msra.mxu0 0
        %828 = vmatprep.subr.bf16.mxu0 0
        %829 = vmatpush2.bf16.msra.mxu0 0
        %830 = vmatprep.subr.bf16.mxu0 0
        %831 = vmatpush2.bf16.msra.mxu0 0
        %832 = vmatprep.subr.bf16.mxu0 0
        %833 = vmatpush2.bf16.msra.mxu0 0
        %834 = vmatprep.subr.bf16.mxu0 0
        %835 = vmatpush2.bf16.msra.mxu0 0
        %836 = vmatprep.subr.bf16.mxu0 0
        %837 = vmatpush2.bf16.msra.mxu0 0
        %838 = vmatprep.mubr.bf16.mxu0 0
        %839 = vmatmul.mubr.bf16.gmra.mxu0 %v789
        %v840 = vpop.f32.mrf.mxu0
        %v841 = vadd.f32 %v700, %v840
        %v842 = vpop.f32.mrf.mxu0
        %v843 = vadd.f32 %v700, %v842
        %v844 = vpop.f32.mrf.mxu0
        %v845 = vadd.f32 %v705, %v844
        %v846 = vpop.f32.mrf.mxu0
        %v847 = vadd.f32 %v705, %v846
        %848 = vmatprep.mubr.bf16.mxu0 0
        %849 = vmatmul.mubr.bf16.gmra.mxu0 %v792
        %v850 = vpop.f32.mrf.mxu0
        %v851 = vadd.f32 %v710, %v850
        %v852 = vpop.f32.mrf.mxu0
        %v853 = vadd.f32 %v710, %v852
        %v854 = vpop.f32.mrf.mxu0
        %v855 = vadd.f32 %v715, %v854
        %v856 = vpop.f32.mrf.mxu0
        %v857 = vadd.f32 %v715, %v856
        %858 = vmatprep.mubr.bf16.mxu0 0
        %859 = vmatmul.mubr.bf16.gmra.mxu0 %v795
        %v860 = vpop.f32.mrf.mxu0
        %v861 = vadd.f32 %v720, %v860
        %v862 = vpop.f32.mrf.mxu0
        %v863 = vadd.f32 %v720, %v862
        %v864 = vpop.f32.mrf.mxu0
        %v865 = vadd.f32 %v725, %v864
        %v866 = vpop.f32.mrf.mxu0
        %v867 = vadd.f32 %v725, %v866
        %868 = vmatprep.mubr.bf16.mxu0 0
        %869 = vmatmul.mubr.bf16.gmra.mxu0 %v798
        %v870 = vpop.f32.mrf.mxu0
        %v871 = vadd.f32 %v730, %v870
        %v872 = vpop.f32.mrf.mxu0
        %v873 = vadd.f32 %v730, %v872
        %v874 = vpop.f32.mrf.mxu0
        %v875 = vadd.f32 %v735, %v874
        %v876 = vpop.f32.mrf.mxu0
        %v877 = vadd.f32 %v735, %v876
        %878 = vmatprep.mubr.bf16.mxu0 0
        %879 = vmatmul.mubr.bf16.gmra.mxu0 %v801
        %v880 = vpop.f32.mrf.mxu0
        %v881 = vadd.f32 %v740, %v880
        %v882 = vpop.f32.mrf.mxu0
        %v883 = vadd.f32 %v740, %v882
        %v884 = vpop.f32.mrf.mxu0
        %v885 = vadd.f32 %v745, %v884
        %v886 = vpop.f32.mrf.mxu0
        %v887 = vadd.f32 %v745, %v886
        %888 = vmatprep.mubr.bf16.mxu0 0
        %889 = vmatmul.mubr.bf16.gmra.mxu0 %v804
        %v890 = vpop.f32.mrf.mxu0
        %v891 = vadd.f32 %v750, %v890
        %v892 = vpop.f32.mrf.mxu0
        %v893 = vadd.f32 %v750, %v892
        %v894 = vpop.f32.mrf.mxu0
        %v895 = vadd.f32 %v755, %v894
        %v896 = vpop.f32.mrf.mxu0
        %v897 = vadd.f32 %v755, %v896
        %898 = vdwg.mxu0
        %v899 = vmax.f32 %v841, 0.0
        %v900 = vmax.f32 %v843, 0.0
        %v901 = vmax.f32 %v845, 0.0
        %v902 = vmax.f32 %v847, 0.0
        %v903 = vmax.f32 %v851, 0.0
        %v904 = vmax.f32 %v853, 0.0
        %v905 = vmax.f32 %v855, 0.0
        %v906 = vmax.f32 %v857, 0.0
        %v907 = vmax.f32 %v861, 0.0
        %v908 = vmax.f32 %v863, 0.0
        %v909 = vmax.f32 %v865, 0.0
        %v910 = vmax.f32 %v867, 0.0
        %v911 = vmax.f32 %v871, 0.0
        %v912 = vmax.f32 %v873, 0.0
        %v913 = vmax.f32 %v875, 0.0
        %v914 = vmax.f32 %v877, 0.0
        %v915 = vmax.f32 %v881, 0.0
        %v916 = vmax.f32 %v883, 0.0
        %v917 = vmax.f32 %v885, 0.0
        %v918 = vmax.f32 %v887, 0.0
        %v919 = vmax.f32 %v891, 0.0
        %v920 = vmax.f32 %v893, 0.0
        %v921 = vmax.f32 %v895, 0.0
        %v922 = vmax.f32 %v897, 0.0
        %v923 = vpack.c.bf16 %v901, %v899
        %v924 = vpack.c.bf16 %v902, %v900
        %v925 = vpack.c.bf16 %v905, %v903
        %v926 = vpack.c.bf16 %v906, %v904
        %v927 = vpack.c.bf16 %v909, %v907
        %v928 = vpack.c.bf16 %v910, %v908
        %v929 = vpack.c.bf16 %v913, %v911
        %v930 = vpack.c.bf16 %v914, %v912
        %v931 = vpack.c.bf16 %v917, %v915
        %v932 = vpack.c.bf16 %v918, %v916
        %v933 = vpack.c.bf16 %v921, %v919
        %v934 = vpack.c.bf16 %v922, %v920
        %936 = vset.pattern.permute.xlu0 0
        %937 = vperm.xlu0 %936, %v427
        %v938 = vpop.permute.xlu0 %937
        %941 = vset.pattern.permute.xlu0 0
        %942 = vperm.xlu0 %941, %v428
        %v943 = vpop.permute.xlu0 %942
        %946 = vset.pattern.permute.xlu0 0
        %947 = vperm.xlu0 %946, %v429
        %v948 = vpop.permute.xlu0 %947
        %951 = vset.pattern.permute.xlu0 0
        %952 = vperm.xlu0 %951, %v430
        %v953 = vpop.permute.xlu0 %952
        %956 = vset.pattern.permute.xlu0 0
        %957 = vperm.xlu0 %956, %v431
        %v958 = vpop.permute.xlu0 %957
        %961 = vset.pattern.permute.xlu0 0
        %962 = vperm.xlu0 %961, %v432
        %v963 = vpop.permute.xlu0 %962
        %966 = vset.pattern.permute.xlu0 0
        %967 = vperm.xlu0 %966, %v433
        %v968 = vpop.permute.xlu0 %967
        %971 = vset.pattern.permute.xlu0 0
        %972 = vperm.xlu0 %971, %v434
        %v973 = vpop.permute.xlu0 %972
        %v983 = vunpack.c.l.b16 %v387
        %v984 = vunpack.c.l.b16 %v388
        %v985 = vunpack.c.l.b16 %v389
        %v986 = vunpack.c.l.b16 %v390
        %v987 = vunpack.c.l.b16 %v391
        %v988 = vunpack.c.l.b16 %v392
        %v989 = vunpack.c.l.b16 %v393
        %v990 = vunpack.c.l.b16 %v394
        %v991 = vpack.c.b16 %v984, %v983
        %v992 = vpack.c.b16 %v986, %v985
        %v993 = vpack.c.b16 %v988, %v987
        %v994 = vpack.c.b16 %v990, %v989
        %v996 = vsel %vm787, %v991, 0
        %v999 = vsel %vm787, %v992, 0
        %v1002 = vsel %vm787, %v993, 0
        %v1005 = vsel %vm787, %v994, 0
        %1007 = vmatprep.subr.bf16.mxu0 0
        %1008 = vmatpush1.bf16.msra.mxu0 0
        %1009 = vmatprep.subr.bf16.mxu0 0
        %1010 = vmatpush1.bf16.msra.mxu0 0
        %1011 = vmatprep.subr.bf16.mxu0 %v934
        %1012 = vmatpush1.bf16.msra.mxu0 %v933
        %1013 = vmatprep.subr.bf16.mxu0 %v932
        %1014 = vmatpush1.bf16.msra.mxu0 %v931
        %1015 = vmatprep.subr.bf16.mxu0 %v930
        %1016 = vmatpush1.bf16.msra.mxu0 %v929
        %1017 = vmatprep.subr.bf16.mxu0 %v928
        %1018 = vmatpush1.bf16.msra.mxu0 %v927
        %1019 = vmatprep.subr.bf16.mxu0 %v926
        %1020 = vmatpush1.bf16.msra.mxu0 %v925
        %1021 = vmatprep.subr.bf16.mxu0 %v924
        %1022 = vmatpush1.bf16.msra.mxu0 %v923
        %1023 = vmatprep.subr.bf16.mxu0 0
        %1024 = vmatpush2.bf16.msra.mxu0 0
        %1025 = vmatprep.subr.bf16.mxu0 0
        %1026 = vmatpush2.bf16.msra.mxu0 0
        %1027 = vmatprep.subr.bf16.mxu0 0
        %1028 = vmatpush2.bf16.msra.mxu0 0
        %1029 = vmatprep.subr.bf16.mxu0 0
        %1030 = vmatpush2.bf16.msra.mxu0 0
        %1031 = vmatprep.subr.bf16.mxu0 0
        %1032 = vmatpush2.bf16.msra.mxu0 0
        %1033 = vmatprep.subr.bf16.mxu0 0
        %1034 = vmatpush2.bf16.msra.mxu0 0
        %1035 = vmatprep.subr.bf16.mxu0 0
        %1036 = vmatpush2.bf16.msra.mxu0 0
        %1037 = vmatprep.subr.bf16.mxu0 0
        %1038 = vmatpush2.bf16.msra.mxu0 0
        %1039 = vmatprep.mubr.bf16.mxu0 0
        %1040 = vmatmul.mubr.bf16.gmra.mxu0 %v996
        %v1041 = vpop.f32.mrf.mxu0
        %v1042 = vadd.f32 %v938, %v1041
        %v1043 = vpop.f32.mrf.mxu0
        %v1044 = vadd.f32 %v938, %v1043
        %v1045 = vpop.f32.mrf.mxu0
        %v1046 = vadd.f32 %v943, %v1045
        %v1047 = vpop.f32.mrf.mxu0
        %v1048 = vadd.f32 %v943, %v1047
        %1049 = vmatprep.mubr.bf16.mxu0 0
        %1050 = vmatmul.mubr.bf16.gmra.mxu0 %v999
        %v1051 = vpop.f32.mrf.mxu0
        %v1052 = vadd.f32 %v948, %v1051
        %v1053 = vpop.f32.mrf.mxu0
        %v1054 = vadd.f32 %v948, %v1053
        %v1055 = vpop.f32.mrf.mxu0
        %v1056 = vadd.f32 %v953, %v1055
        %v1057 = vpop.f32.mrf.mxu0
        %v1058 = vadd.f32 %v953, %v1057
        %1059 = vmatprep.mubr.bf16.mxu0 0
        %1060 = vmatmul.mubr.bf16.gmra.mxu0 %v1002
        %v1061 = vpop.f32.mrf.mxu0
        %v1062 = vadd.f32 %v958, %v1061
        %v1063 = vpop.f32.mrf.mxu0
        %v1064 = vadd.f32 %v958, %v1063
        %v1065 = vpop.f32.mrf.mxu0
        %v1066 = vadd.f32 %v963, %v1065
        %v1067 = vpop.f32.mrf.mxu0
        %v1068 = vadd.f32 %v963, %v1067
        %1069 = vmatprep.mubr.bf16.mxu0 0
        %1070 = vmatmul.mubr.bf16.gmra.mxu0 %v1005
        %v1071 = vpop.f32.mrf.mxu0
        %v1072 = vadd.f32 %v968, %v1071
        %v1073 = vpop.f32.mrf.mxu0
        %v1074 = vadd.f32 %v968, %v1073
        %v1075 = vpop.f32.mrf.mxu0
        %v1076 = vadd.f32 %v973, %v1075
        %v1077 = vpop.f32.mrf.mxu0
        %v1078 = vadd.f32 %v973, %v1077
        %1079 = vdwg.mxu0
        %v1080 = vmax.f32 %v1042, 0.0
        %v1081 = vmax.f32 %v1044, 0.0
        %v1082 = vmax.f32 %v1046, 0.0
        %v1083 = vmax.f32 %v1048, 0.0
        %v1084 = vmax.f32 %v1052, 0.0
        %v1085 = vmax.f32 %v1054, 0.0
        %v1086 = vmax.f32 %v1056, 0.0
        %v1087 = vmax.f32 %v1058, 0.0
        %v1088 = vmax.f32 %v1062, 0.0
        %v1089 = vmax.f32 %v1064, 0.0
        %v1090 = vmax.f32 %v1066, 0.0
        %v1091 = vmax.f32 %v1068, 0.0
        %v1092 = vmax.f32 %v1072, 0.0
        %v1093 = vmax.f32 %v1074, 0.0
        %v1094 = vmax.f32 %v1076, 0.0
        %v1095 = vmax.f32 %v1078, 0.0
        %v1096 = vpack.c.bf16 %v1082, %v1080
        %v1097 = vpack.c.bf16 %v1083, %v1081
        %v1098 = vpack.c.bf16 %v1086, %v1084
        %v1099 = vpack.c.bf16 %v1087, %v1085
        %v1100 = vpack.c.bf16 %v1090, %v1088
        %v1101 = vpack.c.bf16 %v1091, %v1089
        %v1102 = vpack.c.bf16 %v1094, %v1092
        %v1103 = vpack.c.bf16 %v1095, %v1093
        %1105 = vset.pattern.permute.xlu0 0
        %1106 = vperm.xlu0 %1105, %v435
        %v1107 = vpop.permute.xlu0 %1106
        %1110 = vset.pattern.permute.xlu0 0
        %1111 = vperm.xlu0 %1110, %v436
        %v1112 = vpop.permute.xlu0 %1111
        %1115 = vset.pattern.permute.xlu0 0
        %1116 = vperm.xlu0 %1115, %v437
        %v1117 = vpop.permute.xlu0 %1116
        %1120 = vset.pattern.permute.xlu0 0
        %1121 = vperm.xlu0 %1120, %v438
        %v1122 = vpop.permute.xlu0 %1121
        %1125 = vset.pattern.permute.xlu0 0
        %1126 = vperm.xlu0 %1125, %v439
        %v1127 = vpop.permute.xlu0 %1126
        %1130 = vset.pattern.permute.xlu0 0
        %1131 = vperm.xlu0 %1130, %v440
        %v1132 = vpop.permute.xlu0 %1131
        %1135 = vset.pattern.permute.xlu0 0
        %1136 = vperm.xlu0 %1135, %v441
        %v1137 = vpop.permute.xlu0 %1136
        %1140 = vset.pattern.permute.xlu0 0
        %1141 = vperm.xlu0 %1140, %v442
        %v1142 = vpop.permute.xlu0 %1141
        %v1152 = vunpack.c.l.b16 %v395
        %v1153 = vunpack.c.l.b16 %v396
        %v1154 = vunpack.c.l.b16 %v397
        %v1155 = vunpack.c.l.b16 %v398
        %v1156 = vunpack.c.l.b16 %v399
        %v1157 = vunpack.c.l.b16 %v400
        %v1158 = vunpack.c.l.b16 %v401
        %v1159 = vunpack.c.l.b16 %v402
        %v1160 = vpack.c.b16 %v1153, %v1152
        %v1161 = vpack.c.b16 %v1155, %v1154
        %v1162 = vpack.c.b16 %v1157, %v1156
        %v1163 = vpack.c.b16 %v1159, %v1158
        %vm1164 = vcmask 523264
        %v1166 = vsel %vm1164, %v1160, 0
        %v1169 = vsel %vm1164, %v1161, 0
        %v1172 = vsel %vm1164, %v1162, 0
        %v1175 = vsel %vm1164, %v1163, 0
        %1177 = vmatprep.subr.bf16.mxu0 0
        %1178 = vmatpush1.bf16.msra.mxu0 0
        %1179 = vmatprep.subr.bf16.mxu0 0
        %1180 = vmatpush1.bf16.msra.mxu0 0
        %1181 = vmatprep.subr.bf16.mxu0 0
        %1182 = vmatpush1.bf16.msra.mxu0 0
        %1183 = vmatprep.subr.bf16.mxu0 0
        %1184 = vmatpush1.bf16.msra.mxu0 0
        %1185 = vmatprep.subr.bf16.mxu0 %v1103
        %1186 = vmatpush1.bf16.msra.mxu0 %v1102
        %1187 = vmatprep.subr.bf16.mxu0 %v1101
        %1188 = vmatpush1.bf16.msra.mxu0 %v1100
        %1189 = vmatprep.subr.bf16.mxu0 %v1099
        %1190 = vmatpush1.bf16.msra.mxu0 %v1098
        %1191 = vmatprep.subr.bf16.mxu0 %v1097
        %1192 = vmatpush1.bf16.msra.mxu0 %v1096
        %1193 = vmatprep.subr.bf16.mxu0 0
        %1194 = vmatpush2.bf16.msra.mxu0 0
        %1195 = vmatprep.subr.bf16.mxu0 0
        %1196 = vmatpush2.bf16.msra.mxu0 0
        %1197 = vmatprep.subr.bf16.mxu0 0
        %1198 = vmatpush2.bf16.msra.mxu0 0
        %1199 = vmatprep.subr.bf16.mxu0 0
        %1200 = vmatpush2.bf16.msra.mxu0 0
        %1201 = vmatprep.subr.bf16.mxu0 0
        %1202 = vmatpush2.bf16.msra.mxu0 0
        %1203 = vmatprep.subr.bf16.mxu0 0
        %1204 = vmatpush2.bf16.msra.mxu0 0
        %1205 = vmatprep.subr.bf16.mxu0 0
        %1206 = vmatpush2.bf16.msra.mxu0 0
        %1207 = vmatprep.subr.bf16.mxu0 0
        %1208 = vmatpush2.bf16.msra.mxu0 0
        %1209 = vmatprep.mubr.bf16.mxu0 0
        %1210 = vmatmul.mubr.bf16.gmra.mxu0 %v1166
        %v1211 = vpop.f32.mrf.mxu0
        %v1212 = vadd.f32 %v1107, %v1211
        %v1213 = vpop.f32.mrf.mxu0
        %v1214 = vadd.f32 %v1107, %v1213
        %v1215 = vpop.f32.mrf.mxu0
        %v1216 = vadd.f32 %v1112, %v1215
        %v1217 = vpop.f32.mrf.mxu0
        %v1218 = vadd.f32 %v1112, %v1217
        %1219 = vmatprep.mubr.bf16.mxu0 0
        %1220 = vmatmul.mubr.bf16.gmra.mxu0 %v1169
        %v1221 = vpop.f32.mrf.mxu0
        %v1222 = vadd.f32 %v1117, %v1221
        %v1223 = vpop.f32.mrf.mxu0
        %v1224 = vadd.f32 %v1117, %v1223
        %v1225 = vpop.f32.mrf.mxu0
        %v1226 = vadd.f32 %v1122, %v1225
        %v1227 = vpop.f32.mrf.mxu0
        %v1228 = vadd.f32 %v1122, %v1227
        %1229 = vmatprep.mubr.bf16.mxu0 0
        %1230 = vmatmul.mubr.bf16.gmra.mxu0 %v1172
        %v1231 = vpop.f32.mrf.mxu0
        %v1232 = vadd.f32 %v1127, %v1231
        %v1233 = vpop.f32.mrf.mxu0
        %v1234 = vadd.f32 %v1127, %v1233
        %v1235 = vpop.f32.mrf.mxu0
        %v1236 = vadd.f32 %v1132, %v1235
        %v1237 = vpop.f32.mrf.mxu0
        %v1238 = vadd.f32 %v1132, %v1237
        %1239 = vmatprep.mubr.bf16.mxu0 0
        %1240 = vmatmul.mubr.bf16.gmra.mxu0 %v1175
        %v1241 = vpop.f32.mrf.mxu0
        %v1242 = vadd.f32 %v1137, %v1241
        %v1243 = vpop.f32.mrf.mxu0
        %v1244 = vadd.f32 %v1137, %v1243
        %v1245 = vpop.f32.mrf.mxu0
        %v1246 = vadd.f32 %v1142, %v1245
        %v1247 = vpop.f32.mrf.mxu0
        %v1248 = vadd.f32 %v1142, %v1247
        %1249 = vdwg.mxu0
        %v1250 = vmax.f32 %v1212, 0.0
        %v1251 = vmax.f32 %v1214, 0.0
        %v1252 = vmax.f32 %v1216, 0.0
        %v1253 = vmax.f32 %v1218, 0.0
        %v1254 = vmax.f32 %v1222, 0.0
        %v1255 = vmax.f32 %v1224, 0.0
        %v1256 = vmax.f32 %v1226, 0.0
        %v1257 = vmax.f32 %v1228, 0.0
        %v1258 = vmax.f32 %v1232, 0.0
        %v1259 = vmax.f32 %v1234, 0.0
        %v1260 = vmax.f32 %v1236, 0.0
        %v1261 = vmax.f32 %v1238, 0.0
        %v1262 = vmax.f32 %v1242, 0.0
        %v1263 = vmax.f32 %v1244, 0.0
        %v1264 = vmax.f32 %v1246, 0.0
        %v1265 = vmax.f32 %v1248, 0.0
        %1266 = vst [vmem:[%s350] sm:$0xff] %v1250
        %1267 = vst [vmem:[%s350 + $0x8] sm:$0xff] %v1251
        %1268 = vst [vmem:[%s350 + $0x10] sm:$0xff] %v1252
        %1269 = vst [vmem:[%s350 + $0x18] sm:$0xff] %v1253
        %1270 = vst [vmem:[%s350 + $0x20] sm:$0xff] %v1254
        %1271 = vst [vmem:[%s350 + $0x28] sm:$0xff] %v1255
        %1272 = vst [vmem:[%s350 + $0x30] sm:$0xff] %v1256
        %1273 = vst [vmem:[%s350 + $0x38] sm:$0xff] %v1257
        %1274 = vst [vmem:[%s350 + $0x40] sm:$0xff] %v1258
        %1275 = vst [vmem:[%s350 + $0x48] sm:$0xff] %v1259
        %1276 = vst [vmem:[%s350 + $0x50] sm:$0xff] %v1260
        %1277 = vst [vmem:[%s350 + $0x58] sm:$0xff] %v1261
        %1278 = vst [vmem:[%s350 + $0x60] sm:$0xff] %v1262
        %1279 = vst [vmem:[%s350 + $0x68] sm:$0xff] %v1263
        %1280 = vst [vmem:[%s350 + $0x70] sm:$0xff] %v1264
        %1281 = vst [vmem:[%s350 + $0x78] sm:$0xff] %v1265
        %s1282 = sand.u32 %s241, 1
        %s1283 = scalar_lea.sflag [#allocation3], %s1282
        %s1284 = sand.u32 %s241, 1
        %s1285 = smul.addr %s1284, 128
        %s1286 = scalar_lea.vmem [#allocation2], %s1285
        // Predicated region
        $region57: #{face_rotate_convolution.1} parent=55 // pred_check
          %p1287 = pneg %p251
        $region58: #{face_rotate_convolution.1} parent=55 // pred_check_branch
          %1289 = sbr.rel (%p1287) target = $region60
        $region59: #{face_rotate_convolution.1} parent=55 // pred_region
          %s1290 = smul.u32 2, %s28
          %s1292 = ssub.s32 2048, 2048
          %1293 = vsyncadd %s1283, %s1292
          %s1294 = smul.addr %s27, 16
          %s1295 = sadd.s32 %s1290, %s1294
          %s1296 = smul.addr %s1295, 128
          %s1297 = scalar_lea.hbm %s9, %s1296
          %s1298 = sshll.u32 %s1286, 4
          %s1299 = int_to_ptr.vmem [resolvable:$true] %s1298
          %1304 = dma.vmem_to_hbm [thread:$0]  %s1299, 2048, %s1297, %s1283, 256, 256, 16
        $region60: #{face_rotate_convolution.1} parent=55 // pred_fallthru
          _
      $region56: #{face_rotate_convolution.1} parent=5 // pred_fallthru
        _
      %p1305 = scmp.le.s32.totalorder 2, %s18
      // Predicated region
      $region61: #{face_rotate_convolution.1} parent=5 // pred_check
        %p1306 = pneg %p1305
      $region62: #{face_rotate_convolution.1} parent=5 // pred_check_branch
        %1308 = sbr.rel (%p1306) target = $region64
      $region63: #{face_rotate_convolution.1} parent=5 // pred_region
        %s1309 = ssub.s32 %s18, 2
        // Predicated region
        $region65: #{face_rotate_convolution.1} parent=63 // pred_check
          %p1310 = pneg %p257
        $region66: #{face_rotate_convolution.1} parent=63 // pred_check_branch
          %1312 = sbr.rel (%p1310) target = $region68
        $region67: #{face_rotate_convolution.1} parent=63 // pred_region
          %s1313 = sand.u32 %s242, 1
          %s1314 = scalar_lea.sflag [#allocation3], %s1313
          %s1315 = sand.u32 %s242, 1
          %s1316 = smul.addr %s1315, 128
          %s1317 = scalar_lea.vmem [#allocation2], %s1316
          %1318 = dma.done %s1314, 2048
        $region68: #{face_rotate_convolution.1} parent=63 // pred_fallthru
          _
      $region64: #{face_rotate_convolution.1} parent=5 // pred_fallthru
        _
    $region6: #{face_rotate_convolution.1} parent=1 // loop_footer
      %s22 = sadd.s32 1, %s18
    $region7: #{face_rotate_convolution.1} parent=1 // loop_footer_branch
      %17 = sbr.rel target = $region3
    $region8: #{face_rotate_convolution.1} parent=1 // loop_exit
      _
    %1319 = vsyncpa [#allocation3], 1
    %s1320 = scalar_lea.sflag [#allocation3], 1
    %1321 = vsyncpa %s1320, 1

</llo_original>
